<compile_context>
chip_gen: v7x
topology: tpu7x:2x2x1
jax: 0.10.0
libtpu: 0.0.40
codegen_flags: <defaults>
</compile_context>

<pallas_src>
import functools

import jax
import jax.numpy as jnp
from jax.experimental import pallas as pl
from jax.experimental.pallas import tpu as pltpu


def _vib_kernel(x_ref, eps_ref, we_ref, be_ref, *refs, fuse_heads, bt):
    """Processes one (bt, C, TS) channel-major / spatial-on-lanes tile.

    x_ref, eps_ref            : (bt, C, TS)  io dtype (bf16 or f32)
    we_ref (2C, C), be_ref (2C, 1)           encoder 1x1 conv (bias kept f32)
    fused : wh_ref (2C, 2C), bh_ref (2C, 1)  concatenated [mu; std] heads
    split : wm_ref (C, 2C), bm_ref (C, 1), ws_ref (C, 2C), bs_ref (C, 1)
    mu/std/z outputs          : (bt, C, TS)  io dtype
    """
    if fuse_heads:
        wh_ref, bh_ref, mu_ref, std_ref, z_ref = refs
    else:
        wm_ref, bm_ref, ws_ref, bs_ref, mu_ref, std_ref, z_ref = refs
    C = mu_ref.shape[1]

    we = we_ref[...]
    be = be_ref[...]
    if fuse_heads:
        wh = wh_ref[...]
        bh = bh_ref[...]
    else:
        wm, bm = wm_ref[...], bm_ref[...]
        ws, bs = ws_ref[...], bs_ref[...]

    for b in range(bt):  # small static unroll over the batch rows of the tile
        x = x_ref[b]                          # (C, TS), native MXU operand dtype
        eps = eps_ref[b].astype(jnp.float32)  # elementwise math stays f32 (v5e)

        # encoder 1x1 conv == channel matmul; accumulate in f32, ReLU in f32.
        enc = jnp.dot(we, x, preferred_element_type=jnp.float32) + be
        enc = jnp.maximum(enc, 0.0)           # (2C, TS) f32
        enc = enc.astype(we.dtype)            # back to native MXU operand dtype

        if fuse_heads:
            # single (2C, 2C) @ (2C, TS) MXU pass; slice is sublane-aligned
            # because the wrapper only takes this path when C % 8 == 0.
            heads = jnp.dot(wh, enc, preferred_element_type=jnp.float32) + bh
            mu = heads[:C]
            s_pre = heads[C:] - 5.0
        else:
            mu = jnp.dot(wm, enc, preferred_element_type=jnp.float32) + bm
            s_pre = jnp.dot(ws, enc, preferred_element_type=jnp.float32) + bs - 5.0

        # numerically stable single-path softplus: max(s,0) + log1p(exp(-|s|))
        std = jnp.maximum(s_pre, 0.0) + jnp.log1p(jnp.exp(-jnp.abs(s_pre)))
        z = mu + std * eps                    # reparameterization

        mu_ref[b] = mu.astype(mu_ref.dtype)
        std_ref[b] = std.astype(std_ref.dtype)
        z_ref[b] = z.astype(z_ref.dtype)


def _largest_aligned_divisor(n, cap):
    """Largest multiple of 128 that divides n (n % 128 == 0), capped at cap."""
    t = min(n, max(128, (cap // 128) * 128))
    while n % t:
        t -= 128
    return t


def _choose_tiles(B, C, HWp, io_bytes, tile_budget_bytes):
    """Pick (batch_tile, spatial_tile) from a VMEM byte budget.

    Per (batch row, lane) of a tile the pipeline holds:
      5 streamed arrays (x, eps, mu, std, z) x 2 pipeline buffers x io_bytes x C
    plus ~9 C-row f32 temporaries (casts, enc, heads, mu, s_pre/std, z).
    """
    per_lane = C * (5 * 2 * io_bytes + 9 * 4)
    max_lanes = max(128, tile_budget_bytes // per_lane)

    ts = _largest_aligned_divisor(HWp, max_lanes)

    # Fold batch rows into the tile when the spatial extent alone is too small
    # to amortize the ~0.35us/grid-step overhead; keep >= 2 grid steps so both
    # v7x TensorCores get work, and cap the static unroll at 8.
    total_steps_bt1 = B * (HWp // ts)
    bt = 1
    for cand in range(min(B, 8), 0, -1):
        if B % cand:
            continue
        steps = (B // cand) * (HWp // ts)
        if cand * ts <= max_lanes and steps >= min(2, total_steps_bt1):
            bt = cand
            break

    # If the whole problem collapsed to a single grid step, split the spatial
    # axis so a 2-TensorCore chip (v7x) does not leave one core idle.
    if (B // bt) * (HWp // ts) < 2 and HWp // 128 >= 2:
        t = ts - 128
        while t >= 128 and HWp % t:
            t -= 128
        if t >= 128:
            ts = t
    return bt, ts


def vib_forward(x_nchw, eps_nchw, params, *, io_dtype=jnp.bfloat16,
                vmem_tile_budget=24 * 1024 * 1024,
                vmem_limit_bytes=48 * 1024 * 1024):
    """x_nchw, eps_nchw: (B, C, H, W) float32.

    Returns (mu, std, z), each (B, C, H, W) in `io_dtype` (bf16 by default to
    halve HBM traffic on this bandwidth-bound op; pass io_dtype=jnp.float32
    for bit-tight agreement with the PyTorch/f32 reference).
    """
    B, C, H, W = x_nchw.shape
    C2 = 2 * C
    HW = H * W
    HWp = ((HW + 127) // 128) * 128          # lane-dense stores: pad spatial
    io_bytes = jnp.dtype(io_dtype).itemsize

    # no transposes: flatten spatial (free reshape), pad lanes if needed
    x_rows = x_nchw.reshape(B, C, HW).astype(io_dtype)
    eps_rows = eps_nchw.reshape(B, C, HW).astype(io_dtype)
    if HWp != HW:
        pad = ((0, 0), (0, 0), (0, HWp - HW))
        x_rows = jnp.pad(x_rows, pad)
        eps_rows = jnp.pad(eps_rows, pad)

    we = params["we"].astype(io_dtype)
    be = params["be"].astype(jnp.float32)    # biases add into f32 accumulators

    fuse_heads = (C % 8 == 0)                # sublane-aligned heads[:C] slice
    if fuse_heads:
        head_args = [
            jnp.concatenate([params["wm"], params["ws"]], axis=0).astype(io_dtype),
            jnp.concatenate([params["bm"], params["bs"]], axis=0).astype(jnp.float32),
        ]
        head_shapes = [(C2, C2), (C2, 1)]
    else:
        head_args = [
            params["wm"].astype(io_dtype), params["bm"].astype(jnp.float32),
            params["ws"].astype(io_dtype), params["bs"].astype(jnp.float32),
        ]
        head_shapes = [(C, C2), (C, 1), (C, C2), (C, 1)]

    # Reserve (worst-case double-buffered) weight bytes out of the tile budget
    # so the same tiling also fits v7x's 64 MiB VMEM for large C.
    w_vmem = ((C2 * C + sum(s[0] * s[1] for s in head_shapes[::2])) * io_bytes
              + 2 * C2 * 4) * 2
    bt, ts = _choose_tiles(B, C, HWp, io_bytes,
                           max(vmem_tile_budget - w_vmem, 2 * 1024 * 1024))
    grid = (B // bt, HWp // ts)

    tile_spec = pl.BlockSpec((bt, C, ts), lambda b, s: (b, 0, s))

    def _const_specs(single_buffer):
        shapes = [(C2, C), (C2, 1)] + head_shapes
        kw = {"pipeline_mode": pl.Buffered(1)} if single_buffer else {}
        return [pl.BlockSpec(shape, lambda b, s: (0, 0), **kw) for shape in shapes]

    n_elem = B * HWp
    cost = pl.CostEstimate(
        flops=12 * C * C * n_elem,                       # encoder + heads
        transcendentals=2 * C * n_elem,                  # exp + log1p / element
        bytes_accessed=5 * n_elem * C * io_bytes
        + (C2 * C + C2 * C2) * io_bytes + 2 * C2 * 4,
    )

    kernel = functools.partial(_vib_kernel, fuse_heads=fuse_heads, bt=bt)
    out_shape = (jax.ShapeDtypeStruct((B, C, HWp), io_dtype),) * 3

    def _call(single_buffer_weights):
        out = pl.pallas_call(
            kernel,
            out_shape=out_shape,
            grid_spec=pltpu.PrefetchScalarGridSpec(
                num_scalar_prefetch=0,
                grid=grid,
                in_specs=[tile_spec, tile_spec] + _const_specs(single_buffer_weights),
                out_specs=[tile_spec, tile_spec, tile_spec],
            ),
            compiler_params=pltpu.CompilerParams(
                dimension_semantics=("parallel", "parallel"),
                vmem_limit_bytes=vmem_limit_bytes,
            ),
            cost_estimate=cost,
        )(x_rows, eps_rows, we, be, *head_args)
        jax.block_until_ready(out)
        return out

    try:
        # single-buffer the constant-index weight blocks (saves VMEM on v7x)
        mu, std, z = _call(True)
    except Exception:
        # pl.Buffered(1) not supported on this jax/libtpu: default buffering.
        mu, std, z = _call(False)

    def _unpack(a):
        if HWp != HW:
            a = a[:, :, :HW]
        return a.reshape(B, C, H, W)

    return _unpack(mu), _unpack(std), _unpack(z)


def init_params(key, in_channel):
    """Deterministic init matching nn.Conv2d(k=1) parameter shapes.

    Weights are stored (out_channels, in_channels) — PyTorch's (out, in, 1, 1)
    with the 1x1 kernel dims squeezed — so W @ x_block is the conv output in
    channel-major layout. Biases are (out, 1).
    """
    C, C2 = in_channel, 2 * in_channel
    k = jax.random.split(key, 6)
    se = 1.0 / float(C) ** 0.5       # encoder fan_in = C
    sh = 1.0 / float(C2) ** 0.5      # head fan_in = 2C
    return {
        "we": jax.random.uniform(k[0], (C2, C), jnp.float32, -se, se),
        "be": jax.random.uniform(k[1], (C2, 1), jnp.float32, -se, se),
        "wm": jax.random.uniform(k[2], (C, C2), jnp.float32, -sh, sh),
        "bm": jax.random.uniform(k[3], (C, 1), jnp.float32, -sh, sh),
        "ws": jax.random.uniform(k[4], (C, C2), jnp.float32, -sh, sh),
        "bs": jax.random.uniform(k[5], (C, 1), jnp.float32, -sh, sh),
    }


def vib_reference(x_nchw, eps_nchw, params):
    """Plain-JAX f32 reference (mirrors the PyTorch module)."""
    B, C, H, W = x_nchw.shape
    x = x_nchw.reshape(B, C, H * W)
    eps = eps_nchw.reshape(B, C, H * W)
    enc = jnp.maximum(
        jnp.einsum("oc,bcs->bos", params["we"], x) + params["be"][None], 0.0)
    mu = jnp.einsum("oc,bcs->bos", params["wm"], enc) + params["bm"][None]
    std = jax.nn.softplus(
        jnp.einsum("oc,bcs->bos", params["ws"], enc) + params["bs"][None] - 5.0)
    z = mu + std * eps
    shape = (B, C, H, W)
    return mu.reshape(shape), std.reshape(shape), z.reshape(shape)


if __name__ == "__main__":
    key = jax.random.PRNGKey(0)

    # (B, C, H, W): the first config exercises the split-head path (C % 8 != 0),
    # the second exercises the fused-head path plus HW->128 lane padding (14x14).
    configs = [(2, 4, 16, 16), (2, 8, 14, 14)]

    for (B, C, H, W) in configs:
        kp, kx, ke, key = jax.random.split(key, 4)
        params = init_params(kp, C)
        x = jax.random.normal(kx, (B, C, H, W), jnp.float32)
        # eps ~ N(0,1) supplied explicitly (deterministic stand-in for randn_like)
        eps = jax.random.normal(ke, (B, C, H, W), jnp.float32)

        mu_r, std_r, z_r = vib_reference(x, eps, params)

        # f32 I/O path: tight agreement with the reference
        mu, std, z = vib_forward(x, eps, params, io_dtype=jnp.float32)
        jax.block_until_ready((mu, std, z))
        assert jnp.allclose(mu, mu_r, atol=2e-4, rtol=2e-4), "mu mismatch (f32)"
        assert jnp.allclose(std, std_r, atol=2e-4, rtol=2e-4), "std mismatch (f32)"
        assert jnp.allclose(z, z_r, atol=2e-4, rtol=2e-4), "z mismatch (f32)"

        # bf16 I/O path (default; halves HBM traffic on this bandwidth-bound op)
        mu, std, z = vib_forward(x, eps, params)
        jax.block_until_ready((mu, std, z))
        assert jnp.allclose(mu.astype(jnp.float32), mu_r, atol=3e-2, rtol=3e-2), \
            "mu mismatch (bf16)"
        assert jnp.allclose(std.astype(jnp.float32), std_r, atol=3e-2, rtol=3e-2), \
            "std mismatch (bf16)"
        assert jnp.allclose(z.astype(jnp.float32), z_r, atol=3e-2, rtol=3e-2), \
            "z mismatch (bf16)"

    print("KERNEL_OK")
</pallas_src>

<mosaic_0001>
module attributes {stable_mosaic.version = 11 : i64} {
  func.func @_vib_kernel(%arg0: i32, %arg1: i32, %arg2: memref<1x4x256xf32, #tpu.memory_space<vmem>>, %arg3: memref<1x4x256xf32, #tpu.memory_space<vmem>>, %arg4: memref<8x4xf32, #tpu.memory_space<vmem>>, %arg5: memref<8x1xf32, #tpu.memory_space<vmem>>, %arg6: memref<4x8xf32, #tpu.memory_space<vmem>>, %arg7: memref<4x1xf32, #tpu.memory_space<vmem>>, %arg8: memref<4x8xf32, #tpu.memory_space<vmem>>, %arg9: memref<4x1xf32, #tpu.memory_space<vmem>>, %arg10: memref<1x4x256xf32, #tpu.memory_space<vmem>>, %arg11: memref<1x4x256xf32, #tpu.memory_space<vmem>>, %arg12: memref<1x4x256xf32, #tpu.memory_space<vmem>>) attributes {dimension_semantics = [#tpu.dimension_semantics<parallel>, #tpu.dimension_semantics<parallel>], iteration_bounds = array<i64: 2, 1>, scalar_prefetch = 0 : i64, scratch_operands = 0 : i64, tpu.core_type = #tpu.core_type<tc>, window_params = [{transform_indices = @transform_0, window_bounds = array<i64: 1, 4, 256>}, {transform_indices = @transform_1, window_bounds = array<i64: 1, 4, 256>}, {pipeline_mode = #tpu.pipeline_mode<synchronous>, transform_indices = @transform_2, window_bounds = array<i64: 8, 4>}, {pipeline_mode = #tpu.pipeline_mode<synchronous>, transform_indices = @transform_3, window_bounds = array<i64: 8, 1>}, {pipeline_mode = #tpu.pipeline_mode<synchronous>, transform_indices = @transform_4, window_bounds = array<i64: 4, 8>}, {pipeline_mode = #tpu.pipeline_mode<synchronous>, transform_indices = @transform_5, window_bounds = array<i64: 4, 1>}, {pipeline_mode = #tpu.pipeline_mode<synchronous>, transform_indices = @transform_6, window_bounds = array<i64: 4, 8>}, {pipeline_mode = #tpu.pipeline_mode<synchronous>, transform_indices = @transform_7, window_bounds = array<i64: 4, 1>}, {transform_indices = @transform_8, window_bounds = array<i64: 1, 4, 256>}, {transform_indices = @transform_9, window_bounds = array<i64: 1, 4, 256>}, {transform_indices = @transform_10, window_bounds = array<i64: 1, 4, 256>}]} {
    %c0 = arith.constant 0 : index
    %c0_0 = arith.constant 0 : index
    %0 = vector.load %arg4[%c0, %c0_0] : memref<8x4xf32, #tpu.memory_space<vmem>>, vector<8x4xf32>
    %c0_1 = arith.constant 0 : index
    %c0_2 = arith.constant 0 : index
    %1 = vector.load %arg5[%c0_1, %c0_2] : memref<8x1xf32, #tpu.memory_space<vmem>>, vector<8x1xf32>
    %c0_3 = arith.constant 0 : index
    %c0_4 = arith.constant 0 : index
    %2 = vector.load %arg6[%c0_3, %c0_4] : memref<4x8xf32, #tpu.memory_space<vmem>>, vector<4x8xf32>
    %c0_5 = arith.constant 0 : index
    %c0_6 = arith.constant 0 : index
    %3 = vector.load %arg7[%c0_5, %c0_6] : memref<4x1xf32, #tpu.memory_space<vmem>>, vector<4x1xf32>
    %c0_7 = arith.constant 0 : index
    %c0_8 = arith.constant 0 : index
    %4 = vector.load %arg8[%c0_7, %c0_8] : memref<4x8xf32, #tpu.memory_space<vmem>>, vector<4x8xf32>
    %c0_9 = arith.constant 0 : index
    %c0_10 = arith.constant 0 : index
    %5 = vector.load %arg9[%c0_9, %c0_10] : memref<4x1xf32, #tpu.memory_space<vmem>>, vector<4x1xf32>
    %c0_11 = arith.constant 0 : index
    %c0_12 = arith.constant 0 : index
    %c0_13 = arith.constant 0 : index
    %6 = vector.load %arg2[%c0_11, %c0_12, %c0_13] : memref<1x4x256xf32, #tpu.memory_space<vmem>>, vector<1x4x256xf32>
    %7 = vector.shape_cast %6 : vector<1x4x256xf32> to vector<4x256xf32>
    %c0_14 = arith.constant 0 : index
    %c0_15 = arith.constant 0 : index
    %c0_16 = arith.constant 0 : index
    %8 = vector.load %arg3[%c0_14, %c0_15, %c0_16] : memref<1x4x256xf32, #tpu.memory_space<vmem>>, vector<1x4x256xf32>
    %9 = vector.shape_cast %8 : vector<1x4x256xf32> to vector<4x256xf32>
    %cst = arith.constant dense<0.000000e+00> : vector<8x256xf32>
    %10 = tpu.matmul %0, %7, %cst {dimension_numbers = #tpu.dot_dimension_numbers<[1], [0], [0], [1], [0, 0, 1, 1], [], []>} : vector<8x4xf32>, vector<4x256xf32>, vector<8x256xf32> -> vector<8x256xf32>
    %11 = vector.broadcast %1 : vector<8x1xf32> to vector<8x256xf32>
    %12 = arith.addf %10, %11 : vector<8x256xf32>
    %cst_17 = arith.constant 0.000000e+00 : f32
    %13 = vector.broadcast %cst_17 : f32 to vector<8x256xf32>
    %14 = arith.maximumf %12, %13 : vector<8x256xf32>
    %cst_18 = arith.constant dense<0.000000e+00> : vector<4x256xf32>
    %15 = tpu.matmul %2, %14, %cst_18 {dimension_numbers = #tpu.dot_dimension_numbers<[1], [0], [0], [1], [0, 0, 1, 1], [], []>} : vector<4x8xf32>, vector<8x256xf32>, vector<4x256xf32> -> vector<4x256xf32>
    %16 = vector.broadcast %3 : vector<4x1xf32> to vector<4x256xf32>
    %17 = arith.addf %15, %16 : vector<4x256xf32>
    %cst_19 = arith.constant dense<0.000000e+00> : vector<4x256xf32>
    %18 = tpu.matmul %4, %14, %cst_19 {dimension_numbers = #tpu.dot_dimension_numbers<[1], [0], [0], [1], [0, 0, 1, 1], [], []>} : vector<4x8xf32>, vector<8x256xf32>, vector<4x256xf32> -> vector<4x256xf32>
    %19 = vector.broadcast %5 : vector<4x1xf32> to vector<4x256xf32>
    %20 = arith.addf %18, %19 : vector<4x256xf32>
    %cst_20 = arith.constant 5.000000e+00 : f32
    %21 = vector.broadcast %cst_20 : f32 to vector<4x256xf32>
    %22 = arith.subf %20, %21 : vector<4x256xf32>
    %cst_21 = arith.constant 0.000000e+00 : f32
    %23 = vector.broadcast %cst_21 : f32 to vector<4x256xf32>
    %24 = arith.maximumf %22, %23 : vector<4x256xf32>
    %25 = math.absf %22 : vector<4x256xf32>
    %cst_22 = arith.constant 0.000000e+00 : f32
    %26 = vector.broadcast %cst_22 : f32 to vector<4x256xf32>
    %27 = arith.subf %26, %25 : vector<4x256xf32>
    %28 = math.exp %27 : vector<4x256xf32>
    %29 = math.log1p %28 : vector<4x256xf32>
    %30 = arith.addf %24, %29 : vector<4x256xf32>
    %31 = arith.mulf %30, %9 : vector<4x256xf32>
    %32 = arith.addf %17, %31 : vector<4x256xf32>
    %c0_23 = arith.constant 0 : index
    %c0_24 = arith.constant 0 : index
    %c0_25 = arith.constant 0 : index
    %33 = vector.load %arg10[%c0_23, %c0_24, %c0_25] : memref<1x4x256xf32, #tpu.memory_space<vmem>>, vector<1x4x256xf32>
    %34 = vector.shape_cast %33 : vector<1x4x256xf32> to vector<4x256xf32>
    %35 = vector.shape_cast %17 : vector<4x256xf32> to vector<1x4x256xf32>
    tpu.vector_store %arg10[%c0_23, %c0_24, %c0_25], %35 {strides = array<i32>} : memref<1x4x256xf32, #tpu.memory_space<vmem>>, vector<1x4x256xf32>,
    %c0_26 = arith.constant 0 : index
    %c0_27 = arith.constant 0 : index
    %c0_28 = arith.constant 0 : index
    %36 = vector.load %arg11[%c0_26, %c0_27, %c0_28] : memref<1x4x256xf32, #tpu.memory_space<vmem>>, vector<1x4x256xf32>
    %37 = vector.shape_cast %36 : vector<1x4x256xf32> to vector<4x256xf32>
    %38 = vector.shape_cast %30 : vector<4x256xf32> to vector<1x4x256xf32>
    tpu.vector_store %arg11[%c0_26, %c0_27, %c0_28], %38 {strides = array<i32>} : memref<1x4x256xf32, #tpu.memory_space<vmem>>, vector<1x4x256xf32>,
    %c0_29 = arith.constant 0 : index
    %c0_30 = arith.constant 0 : index
    %c0_31 = arith.constant 0 : index
    %39 = vector.load %arg12[%c0_29, %c0_30, %c0_31] : memref<1x4x256xf32, #tpu.memory_space<vmem>>, vector<1x4x256xf32>
    %40 = vector.shape_cast %39 : vector<1x4x256xf32> to vector<4x256xf32>
    %41 = vector.shape_cast %32 : vector<4x256xf32> to vector<1x4x256xf32>
    tpu.vector_store %arg12[%c0_29, %c0_30, %c0_31], %41 {strides = array<i32>} : memref<1x4x256xf32, #tpu.memory_space<vmem>>, vector<1x4x256xf32>,
    return
  }
  func.func @transform_0(%arg0: i32, %arg1: i32) -> (i32, i32, i32) {
    %c0_i32 = arith.constant 0 : i32
    %c0_i32_0 = arith.constant 0 : i32
    return %arg0, %c0_i32, %arg1 : i32, i32, i32
  }
  func.func @transform_1(%arg0: i32, %arg1: i32) -> (i32, i32, i32) {
    %c0_i32 = arith.constant 0 : i32
    %c0_i32_0 = arith.constant 0 : i32
    return %arg0, %c0_i32, %arg1 : i32, i32, i32
  }
  func.func @transform_2(%arg0: i32, %arg1: i32) -> (i32, i32) {
    %c0_i32 = arith.constant 0 : i32
    %c0_i32_0 = arith.constant 0 : i32
    %c0_i32_1 = arith.constant 0 : i32
    return %c0_i32, %c0_i32_0 : i32, i32
  }
  func.func @transform_3(%arg0: i32, %arg1: i32) -> (i32, i32) {
    %c0_i32 = arith.constant 0 : i32
    %c0_i32_0 = arith.constant 0 : i32
    %c0_i32_1 = arith.constant 0 : i32
    return %c0_i32, %c0_i32_0 : i32, i32
  }
  func.func @transform_4(%arg0: i32, %arg1: i32) -> (i32, i32) {
    %c0_i32 = arith.constant 0 : i32
    %c0_i32_0 = arith.constant 0 : i32
    %c0_i32_1 = arith.constant 0 : i32
    return %c0_i32, %c0_i32_0 : i32, i32
  }
  func.func @transform_5(%arg0: i32, %arg1: i32) -> (i32, i32) {
    %c0_i32 = arith.constant 0 : i32
    %c0_i32_0 = arith.constant 0 : i32
    %c0_i32_1 = arith.constant 0 : i32
    return %c0_i32, %c0_i32_0 : i32, i32
  }
  func.func @transform_6(%arg0: i32, %arg1: i32) -> (i32, i32) {
    %c0_i32 = arith.constant 0 : i32
    %c0_i32_0 = arith.constant 0 : i32
    %c0_i32_1 = arith.constant 0 : i32
    return %c0_i32, %c0_i32_0 : i32, i32
  }
  func.func @transform_7(%arg0: i32, %arg1: i32) -> (i32, i32) {
    %c0_i32 = arith.constant 0 : i32
    %c0_i32_0 = arith.constant 0 : i32
    %c0_i32_1 = arith.constant 0 : i32
    return %c0_i32, %c0_i32_0 : i32, i32
  }
  func.func @transform_8(%arg0: i32, %arg1: i32) -> (i32, i32, i32) {
    %c0_i32 = arith.constant 0 : i32
    %c0_i32_0 = arith.constant 0 : i32
    return %arg0, %c0_i32, %arg1 : i32, i32, i32
  }
  func.func @transform_9(%arg0: i32, %arg1: i32) -> (i32, i32, i32) {
    %c0_i32 = arith.constant 0 : i32
    %c0_i32_0 = arith.constant 0 : i32
    return %arg0, %c0_i32, %arg1 : i32, i32, i32
  }
  func.func @transform_10(%arg0: i32, %arg1: i32) -> (i32, i32, i32) {
    %c0_i32 = arith.constant 0 : i32
    %c0_i32_0 = arith.constant 0 : i32
    return %arg0, %c0_i32, %arg1 : i32, i32, i32
  }
}

module attributes {stable_mosaic.version = 11 : i64} {
  func.func @_vib_kernel(%arg0: i32, %arg1: i32, %arg2: memref<1x4x256xf32, #tpu.memory_space<vmem>>, %arg3: memref<1x4x256xf32, #tpu.memory_space<vmem>>, %arg4: memref<8x4xf32, #tpu.memory_space<vmem>>, %arg5: memref<8x1xf32, #tpu.memory_space<vmem>>, %arg6: memref<4x8xf32, #tpu.memory_space<vmem>>, %arg7: memref<4x1xf32, #tpu.memory_space<vmem>>, %arg8: memref<4x8xf32, #tpu.memory_space<vmem>>, %arg9: memref<4x1xf32, #tpu.memory_space<vmem>>, %arg10: memref<1x4x256xf32, #tpu.memory_space<vmem>>, %arg11: memref<1x4x256xf32, #tpu.memory_space<vmem>>, %arg12: memref<1x4x256xf32, #tpu.memory_space<vmem>>) attributes {dimension_semantics = [#tpu.dimension_semantics<parallel>, #tpu.dimension_semantics<parallel>], iteration_bounds = array<i64: 2, 1>, scalar_prefetch = 0 : i64, scratch_operands = 0 : i64, tpu.core_type = #tpu.core_type<tc>, window_params = [{transform_indices = @transform_0, window_bounds = array<i64: 1, 4, 256>}, {transform_indices = @transform_1, window_bounds = array<i64: 1, 4, 256>}, {pipeline_mode = #tpu.pipeline_mode<synchronous>, transform_indices = @transform_2, window_bounds = array<i64: 8, 4>}, {pipeline_mode = #tpu.pipeline_mode<synchronous>, transform_indices = @transform_3, window_bounds = array<i64: 8, 1>}, {pipeline_mode = #tpu.pipeline_mode<synchronous>, transform_indices = @transform_4, window_bounds = array<i64: 4, 8>}, {pipeline_mode = #tpu.pipeline_mode<synchronous>, transform_indices = @transform_5, window_bounds = array<i64: 4, 1>}, {pipeline_mode = #tpu.pipeline_mode<synchronous>, transform_indices = @transform_6, window_bounds = array<i64: 4, 8>}, {pipeline_mode = #tpu.pipeline_mode<synchronous>, transform_indices = @transform_7, window_bounds = array<i64: 4, 1>}, {transform_indices = @transform_8, window_bounds = array<i64: 1, 4, 256>}, {transform_indices = @transform_9, window_bounds = array<i64: 1, 4, 256>}, {transform_indices = @transform_10, window_bounds = array<i64: 1, 4, 256>}]} {
    %c0 = arith.constant 0 : index
    %c0_0 = arith.constant 0 : index
    %0 = vector.load %arg4[%c0, %c0_0] : memref<8x4xf32, #tpu.memory_space<vmem>>, vector<8x4xf32>
    %c0_1 = arith.constant 0 : index
    %c0_2 = arith.constant 0 : index
    %1 = vector.load %arg5[%c0_1, %c0_2] : memref<8x1xf32, #tpu.memory_space<vmem>>, vector<8x1xf32>
    %c0_3 = arith.constant 0 : index
    %c0_4 = arith.constant 0 : index
    %2 = vector.load %arg6[%c0_3, %c0_4] : memref<4x8xf32, #tpu.memory_space<vmem>>, vector<4x8xf32>
    %c0_5 = arith.constant 0 : index
    %c0_6 = arith.constant 0 : index
    %3 = vector.load %arg7[%c0_5, %c0_6] : memref<4x1xf32, #tpu.memory_space<vmem>>, vector<4x1xf32>
    %c0_7 = arith.constant 0 : index
    %c0_8 = arith.constant 0 : index
    %4 = vector.load %arg8[%c0_7, %c0_8] : memref<4x8xf32, #tpu.memory_space<vmem>>, vector<4x8xf32>
    %c0_9 = arith.constant 0 : index
    %c0_10 = arith.constant 0 : index
    %5 = vector.load %arg9[%c0_9, %c0_10] : memref<4x1xf32, #tpu.memory_space<vmem>>, vector<4x1xf32>
    %c0_11 = arith.constant 0 : index
    %c0_12 = arith.constant 0 : index
    %c0_13 = arith.constant 0 : index
    %6 = vector.load %arg2[%c0_11, %c0_12, %c0_13] : memref<1x4x256xf32, #tpu.memory_space<vmem>>, vector<1x4x256xf32>
    %7 = vector.shape_cast %6 : vector<1x4x256xf32> to vector<4x256xf32>
    %c0_14 = arith.constant 0 : index
    %c0_15 = arith.constant 0 : index
    %c0_16 = arith.constant 0 : index
    %8 = vector.load %arg3[%c0_14, %c0_15, %c0_16] : memref<1x4x256xf32, #tpu.memory_space<vmem>>, vector<1x4x256xf32>
    %9 = vector.shape_cast %8 : vector<1x4x256xf32> to vector<4x256xf32>
    %cst = arith.constant dense<0.000000e+00> : vector<8x256xf32>
    %10 = tpu.matmul %0, %7, %cst {dimension_numbers = #tpu.dot_dimension_numbers<[1], [0], [0], [1], [0, 0, 1, 1], [], []>} : vector<8x4xf32>, vector<4x256xf32>, vector<8x256xf32> -> vector<8x256xf32>
    %11 = vector.broadcast %1 : vector<8x1xf32> to vector<8x256xf32>
    %12 = arith.addf %10, %11 : vector<8x256xf32>
    %cst_17 = arith.constant 0.000000e+00 : f32
    %13 = vector.broadcast %cst_17 : f32 to vector<8x256xf32>
    %14 = arith.maximumf %12, %13 : vector<8x256xf32>
    %cst_18 = arith.constant dense<0.000000e+00> : vector<4x256xf32>
    %15 = tpu.matmul %2, %14, %cst_18 {dimension_numbers = #tpu.dot_dimension_numbers<[1], [0], [0], [1], [0, 0, 1, 1], [], []>} : vector<4x8xf32>, vector<8x256xf32>, vector<4x256xf32> -> vector<4x256xf32>
    %16 = vector.broadcast %3 : vector<4x1xf32> to vector<4x256xf32>
    %17 = arith.addf %15, %16 : vector<4x256xf32>
    %cst_19 = arith.constant dense<0.000000e+00> : vector<4x256xf32>
    %18 = tpu.matmul %4, %14, %cst_19 {dimension_numbers = #tpu.dot_dimension_numbers<[1], [0], [0], [1], [0, 0, 1, 1], [], []>} : vector<4x8xf32>, vector<8x256xf32>, vector<4x256xf32> -> vector<4x256xf32>
    %19 = vector.broadcast %5 : vector<4x1xf32> to vector<4x256xf32>
    %20 = arith.addf %18, %19 : vector<4x256xf32>
    %cst_20 = arith.constant 5.000000e+00 : f32
    %21 = vector.broadcast %cst_20 : f32 to vector<4x256xf32>
    %22 = arith.subf %20, %21 : vector<4x256xf32>
    %cst_21 = arith.constant 0.000000e+00 : f32
    %23 = vector.broadcast %cst_21 : f32 to vector<4x256xf32>
    %24 = arith.maximumf %22, %23 : vector<4x256xf32>
    %25 = math.absf %22 : vector<4x256xf32>
    %cst_22 = arith.constant 0.000000e+00 : f32
    %26 = vector.broadcast %cst_22 : f32 to vector<4x256xf32>
    %27 = arith.subf %26, %25 : vector<4x256xf32>
    %28 = math.exp %27 : vector<4x256xf32>
    %29 = math.log1p %28 : vector<4x256xf32>
    %30 = arith.addf %24, %29 : vector<4x256xf32>
    %31 = arith.mulf %30, %9 : vector<4x256xf32>
    %32 = arith.addf %17, %31 : vector<4x256xf32>
    %c0_23 = arith.constant 0 : index
    %c0_24 = arith.constant 0 : index
    %c0_25 = arith.constant 0 : index
    %33 = vector.load %arg10[%c0_23, %c0_24, %c0_25] : memref<1x4x256xf32, #tpu.memory_space<vmem>>, vector<1x4x256xf32>
    %34 = vector.shape_cast %33 : vector<1x4x256xf32> to vector<4x256xf32>
    %35 = vector.shape_cast %17 : vector<4x256xf32> to vector<1x4x256xf32>
    tpu.vector_store %arg10[%c0_23, %c0_24, %c0_25], %35 {strides = array<i32>} : memref<1x4x256xf32, #tpu.memory_space<vmem>>, vector<1x4x256xf32>,
    %c0_26 = arith.constant 0 : index
    %c0_27 = arith.constant 0 : index
    %c0_28 = arith.constant 0 : index
    %36 = vector.load %arg11[%c0_26, %c0_27, %c0_28] : memref<1x4x256xf32, #tpu.memory_space<vmem>>, vector<1x4x256xf32>
    %37 = vector.shape_cast %36 : vector<1x4x256xf32> to vector<4x256xf32>
    %38 = vector.shape_cast %30 : vector<4x256xf32> to vector<1x4x256xf32>
    tpu.vector_store %arg11[%c0_26, %c0_27, %c0_28], %38 {strides = array<i32>} : memref<1x4x256xf32, #tpu.memory_space<vmem>>, vector<1x4x256xf32>,
    %c0_29 = arith.constant 0 : index
    %c0_30 = arith.constant 0 : index
    %c0_31 = arith.constant 0 : index
    %39 = vector.load %arg12[%c0_29, %c0_30, %c0_31] : memref<1x4x256xf32, #tpu.memory_space<vmem>>, vector<1x4x256xf32>
    %40 = vector.shape_cast %39 : vector<1x4x256xf32> to vector<4x256xf32>
    %41 = vector.shape_cast %32 : vector<4x256xf32> to vector<1x4x256xf32>
    tpu.vector_store %arg12[%c0_29, %c0_30, %c0_31], %41 {strides = array<i32>} : memref<1x4x256xf32, #tpu.memory_space<vmem>>, vector<1x4x256xf32>,
    return
  }
  func.func @transform_0(%arg0: i32, %arg1: i32) -> (i32, i32, i32) {
    %c0_i32 = arith.constant 0 : i32
    %c0_i32_0 = arith.constant 0 : i32
    return %arg0, %c0_i32, %arg1 : i32, i32, i32
  }
  func.func @transform_1(%arg0: i32, %arg1: i32) -> (i32, i32, i32) {
    %c0_i32 = arith.constant 0 : i32
    %c0_i32_0 = arith.constant 0 : i32
    return %arg0, %c0_i32, %arg1 : i32, i32, i32
  }
  func.func @transform_2(%arg0: i32, %arg1: i32) -> (i32, i32) {
    %c0_i32 = arith.constant 0 : i32
    %c0_i32_0 = arith.constant 0 : i32
    %c0_i32_1 = arith.constant 0 : i32
    return %c0_i32, %c0_i32_0 : i32, i32
  }
  func.func @transform_3(%arg0: i32, %arg1: i32) -> (i32, i32) {
    %c0_i32 = arith.constant 0 : i32
    %c0_i32_0 = arith.constant 0 : i32
    %c0_i32_1 = arith.constant 0 : i32
    return %c0_i32, %c0_i32_0 : i32, i32
  }
  func.func @transform_4(%arg0: i32, %arg1: i32) -> (i32, i32) {
    %c0_i32 = arith.constant 0 : i32
    %c0_i32_0 = arith.constant 0 : i32
    %c0_i32_1 = arith.constant 0 : i32
    return %c0_i32, %c0_i32_0 : i32, i32
  }
  func.func @transform_5(%arg0: i32, %arg1: i32) -> (i32, i32) {
    %c0_i32 = arith.constant 0 : i32
    %c0_i32_0 = arith.constant 0 : i32
    %c0_i32_1 = arith.constant 0 : i32
    return %c0_i32, %c0_i32_0 : i32, i32
  }
  func.func @transform_6(%arg0: i32, %arg1: i32) -> (i32, i32) {
    %c0_i32 = arith.constant 0 : i32
    %c0_i32_0 = arith.constant 0 : i32
    %c0_i32_1 = arith.constant 0 : i32
    return %c0_i32, %c0_i32_0 : i32, i32
  }
  func.func @transform_7(%arg0: i32, %arg1: i32) -> (i32, i32) {
    %c0_i32 = arith.constant 0 : i32
    %c0_i32_0 = arith.constant 0 : i32
    %c0_i32_1 = arith.constant 0 : i32
    return %c0_i32, %c0_i32_0 : i32, i32
  }
  func.func @transform_8(%arg0: i32, %arg1: i32) -> (i32, i32, i32) {
    %c0_i32 = arith.constant 0 : i32
    %c0_i32_0 = arith.constant 0 : i32
    return %arg0, %c0_i32, %arg1 : i32, i32, i32
  }
  func.func @transform_9(%arg0: i32, %arg1: i32) -> (i32, i32, i32) {
    %c0_i32 = arith.constant 0 : i32
    %c0_i32_0 = arith.constant 0 : i32
    return %arg0, %c0_i32, %arg1 : i32, i32, i32
  }
  func.func @transform_10(%arg0: i32, %arg1: i32) -> (i32, i32, i32) {
    %c0_i32 = arith.constant 0 : i32
    %c0_i32_0 = arith.constant 0 : i32
    return %arg0, %c0_i32, %arg1 : i32, i32, i32
  }
}

</mosaic_0001>

<llo_original>
// kernel: tpu_custom_call.1
$region0: #{tpu_custom_call.1}
  #allocation0 [shape = 'u32[]', space=smem, size = 0x4, offset = 0x4, fixed_abs, tag = 'smem constant byte address 0x4 - core index']
  #allocation1 [shape = 'u32[144,128]{1,0:T(1,128)}', space=vmem, size = 0x12000, scoped, tag = 'internal scratch']
  %s0 = inlined_call_operand.vmem [shape: f32[2,4,256], index: 0, kind: input, shape index: {}]
  %s1 = inlined_call_operand.vmem [shape: f32[2,4,256], index: 1, kind: input, shape index: {}]
  %s2 = inlined_call_operand.vmem [shape: f32[8,4], index: 2, kind: input, shape index: {}]
  %s3 = inlined_call_operand.vmem [shape: f32[8,1], index: 3, kind: input, shape index: {}]
  %s4 = inlined_call_operand.vmem [shape: f32[4,8], index: 4, kind: input, shape index: {}]
  %s5 = inlined_call_operand.vmem [shape: f32[4,1], index: 5, kind: input, shape index: {}]
  %s6 = inlined_call_operand.vmem [shape: f32[4,8], index: 6, kind: input, shape index: {}]
  %s7 = inlined_call_operand.vmem [shape: f32[4,1], index: 7, kind: input, shape index: {}]
  %s8 = inlined_call_operand.hbm [shape: f32[2,4,256], index: 8, kind: output, shape index: {0}]
  %s9 = inlined_call_operand.hbm [shape: f32[2,4,256], index: 9, kind: output, shape index: {1}]
  %s10 = inlined_call_operand.hbm [shape: f32[2,4,256], index: 10, kind: output, shape index: {2}]
  %11 = xla_tuple %s8, %s9, %s10
  %s12 = sld [smem:[#allocation0]]
  $region81: #{tpu_custom_call.1} parent=0
    _
  %s14 = ssub.s32 1, %s12
  %s15 = scalar_select 0, %s14, %s12
  $region1: #{tpu_custom_call.1} parent=0
    #allocation2 [shape = 'u8[8192]{0}', space=vmem, size = 0x2000, scoped, tag = 'output window, operand 0']
    #allocation3 [shape = 's32[2]{0}', space=sflag, size = 0x8, scoped, tag = 'scoped memory for tpu_custom_call.1']
    #allocation4 [shape = 'u8[8192]{0}', space=vmem, size = 0x2000, scoped, tag = 'output window, operand 1']
    #allocation5 [shape = 's32[2]{0}', space=sflag, size = 0x8, scoped, tag = 'scoped memory for tpu_custom_call.1']
    #allocation6 [shape = 'u8[8192]{0}', space=vmem, size = 0x2000, scoped, tag = 'output window, operand 2']
    %16 = vsyncpa [#allocation3], 0
    %s17 = scalar_lea.sflag [#allocation3], 1
    %18 = vsyncpa %s17, 0
    %19 = vsyncpa [#allocation5], 0
    %s20 = scalar_lea.sflag [#allocation5], 1
    %21 = vsyncpa %s20, 0
    loop: start=0, step=1, limit=4
    $region2: #{tpu_custom_call.1} parent=1 // loop_pre_header
      _
    $region3: #{tpu_custom_call.1} parent=1 // loop_header
      %s23 = sphi 0, %s27
      %p24 = scmp.ge.s32.totalorder %s23, 4
      %s30 = sphi 0, %s42
      %s31 = sphi 0, %s38
      %s32 = sphi 0, %s30
      %s33 = sphi 0, %s31
      %s34 = sphi 0, %s32
      %s35 = sphi 0, %s33
      %s47 = sphi 0, %s49
      %s50 = sphi 0, %s47
      %s51 = sphi 0, %s50
      %s67 = sphi 0, %s51
      %s75 = sphi 0, %s77
      %s78 = sphi 0, %s75
      %s79 = sphi 0, %s78
      %s95 = sphi 0, %s79
      %s99 = sphi 0, %s99
      %s101 = sphi 0, %s99
      %s102 = sphi 0, %s101
      %s116 = sphi 0, %s102
      %s120 = sphi 0, %s120
      %s122 = sphi 0, %s120
      %s123 = sphi 0, %s122
      %s137 = sphi 0, %s123
      %s141 = sphi 0, %s141
      %s143 = sphi 0, %s141
      %s144 = sphi 0, %s143
      %s158 = sphi 0, %s144
      %s162 = sphi 0, %s162
      %s164 = sphi 0, %s162
      %s165 = sphi 0, %s164
      %s179 = sphi 0, %s165
      %s183 = sphi 0, %s183
      %s185 = sphi 0, %s183
      %s186 = sphi 0, %s185
      %s200 = sphi 0, %s186
      %s204 = sphi 0, %s204
      %s206 = sphi 0, %s204
      %s207 = sphi 0, %s206
      %s221 = sphi 0, %s207
      %s229 = sphi 0, %s231
      %s232 = sphi 0, %s229
      %s233 = sphi 0, %s232
      %s249 = sphi 0, %s233
      %s257 = sphi 0, %s259
      %s260 = sphi 0, %s257
      %s261 = sphi 0, %s260
      %s277 = sphi 0, %s261
      %s285 = sphi 0, %s287
      %s288 = sphi 0, %s285
      %s289 = sphi 0, %s288
      %s305 = sphi 0, %s289
    $region4: #{tpu_custom_call.1} parent=1 // loop_header_branch
      %26 = sbr.rel (%p24) target = $region8
    $region5: #{tpu_custom_call.1} parent=1 // loop_body
      %s28 = ssub.s32 %s23, 1
      %s29 = ssub.s32 %s23, 2
      %s36 = sadd.s32 1, %s31
      %p37 = scmp.ge.s32.totalorder %s36, 1
      %s38 = scalar_select %p37, 0, %s36
      %s39 = sadd.s32 1, %s30
      %s40 = scalar_select %p37, %s39, %s30
      %p41 = scmp.ge.s32.totalorder %s40, 2
      %s42 = scalar_select %p41, 0, %s40
      %s43 = ssub.s32 %s30, %s42
      %s44 = ssub.s32 %s31, %s38
      %s45 = sor.u32 %s43, %s44
      %p46 = scmp.eq.s32.totalorder %s45, 0
      %s48 = sadd.s32 %s47, 1
      %s49 = scalar_select %p46, %s47, %s48
      %p52 = pneg %p46
      %p53 = scmp.eq.s32.totalorder %s23, 1
      %p54 = por %p52, %p53
      %p55 = scmp.ne.s32.totalorder %s47, %s50
      %p56 = scmp.eq.s32.totalorder %s23, 0
      %p57 = por %p55, %p56
      %p58 = scmp.ne.s32.totalorder %s47, %s50
      %p59 = scmp.eq.s32.totalorder %s28, 1
      %p60 = por %p58, %p59
      %p61 = scmp.ne.s32.totalorder %s50, %s51
      %p62 = scmp.eq.s32.totalorder %s28, 0
      %p63 = por %p61, %p62
      %p64 = scmp.ne.s32.totalorder %s50, %s51
      %p65 = scmp.eq.s32.totalorder %s29, 1
      %p66 = por %p64, %p65
      %p68 = scmp.ne.s32.totalorder %s51, %s67
      %p69 = scmp.eq.s32.totalorder %s29, 0
      %p70 = por %p68, %p69
      %s71 = ssub.s32 %s30, %s42
      %s72 = ssub.s32 %s31, %s38
      %s73 = sor.u32 %s71, %s72
      %p74 = scmp.eq.s32.totalorder %s73, 0
      %s76 = sadd.s32 %s75, 1
      %s77 = scalar_select %p74, %s75, %s76
      %p80 = pneg %p74
      %p81 = scmp.eq.s32.totalorder %s23, 1
      %p82 = por %p80, %p81
      %p83 = scmp.ne.s32.totalorder %s75, %s78
      %p84 = scmp.eq.s32.totalorder %s23, 0
      %p85 = por %p83, %p84
      %p86 = scmp.ne.s32.totalorder %s75, %s78
      %p87 = scmp.eq.s32.totalorder %s28, 1
      %p88 = por %p86, %p87
      %p89 = scmp.ne.s32.totalorder %s78, %s79
      %p90 = scmp.eq.s32.totalorder %s28, 0
      %p91 = por %p89, %p90
      %p92 = scmp.ne.s32.totalorder %s78, %s79
      %p93 = scmp.eq.s32.totalorder %s29, 1
      %p94 = por %p92, %p93
      %p96 = scmp.ne.s32.totalorder %s79, %s95
      %p97 = scmp.eq.s32.totalorder %s29, 0
      %p98 = por %p96, %p97
      %s100 = sadd.s32 %s99, 1
      %p103 = scmp.eq.s32.totalorder %s23, 1
      %p104 = scmp.ne.s32.totalorder %s99, %s101
      %p105 = scmp.eq.s32.totalorder %s23, 0
      %p106 = por %p104, %p105
      %p107 = scmp.ne.s32.totalorder %s99, %s101
      %p108 = scmp.eq.s32.totalorder %s28, 1
      %p109 = por %p107, %p108
      %p110 = scmp.ne.s32.totalorder %s101, %s102
      %p111 = scmp.eq.s32.totalorder %s28, 0
      %p112 = por %p110, %p111
      %p113 = scmp.ne.s32.totalorder %s101, %s102
      %p114 = scmp.eq.s32.totalorder %s29, 1
      %p115 = por %p113, %p114
      %p117 = scmp.ne.s32.totalorder %s102, %s116
      %p118 = scmp.eq.s32.totalorder %s29, 0
      %p119 = por %p117, %p118
      %s121 = sadd.s32 %s120, 1
      %p124 = scmp.eq.s32.totalorder %s23, 1
      %p125 = scmp.ne.s32.totalorder %s120, %s122
      %p126 = scmp.eq.s32.totalorder %s23, 0
      %p127 = por %p125, %p126
      %p128 = scmp.ne.s32.totalorder %s120, %s122
      %p129 = scmp.eq.s32.totalorder %s28, 1
      %p130 = por %p128, %p129
      %p131 = scmp.ne.s32.totalorder %s122, %s123
      %p132 = scmp.eq.s32.totalorder %s28, 0
      %p133 = por %p131, %p132
      %p134 = scmp.ne.s32.totalorder %s122, %s123
      %p135 = scmp.eq.s32.totalorder %s29, 1
      %p136 = por %p134, %p135
      %p138 = scmp.ne.s32.totalorder %s123, %s137
      %p139 = scmp.eq.s32.totalorder %s29, 0
      %p140 = por %p138, %p139
      %s142 = sadd.s32 %s141, 1
      %p145 = scmp.eq.s32.totalorder %s23, 1
      %p146 = scmp.ne.s32.totalorder %s141, %s143
      %p147 = scmp.eq.s32.totalorder %s23, 0
      %p148 = por %p146, %p147
      %p149 = scmp.ne.s32.totalorder %s141, %s143
      %p150 = scmp.eq.s32.totalorder %s28, 1
      %p151 = por %p149, %p150
      %p152 = scmp.ne.s32.totalorder %s143, %s144
      %p153 = scmp.eq.s32.totalorder %s28, 0
      %p154 = por %p152, %p153
      %p155 = scmp.ne.s32.totalorder %s143, %s144
      %p156 = scmp.eq.s32.totalorder %s29, 1
      %p157 = por %p155, %p156
      %p159 = scmp.ne.s32.totalorder %s144, %s158
      %p160 = scmp.eq.s32.totalorder %s29, 0
      %p161 = por %p159, %p160
      %s163 = sadd.s32 %s162, 1
      %p166 = scmp.eq.s32.totalorder %s23, 1
      %p167 = scmp.ne.s32.totalorder %s162, %s164
      %p168 = scmp.eq.s32.totalorder %s23, 0
      %p169 = por %p167, %p168
      %p170 = scmp.ne.s32.totalorder %s162, %s164
      %p171 = scmp.eq.s32.totalorder %s28, 1
      %p172 = por %p170, %p171
      %p173 = scmp.ne.s32.totalorder %s164, %s165
      %p174 = scmp.eq.s32.totalorder %s28, 0
      %p175 = por %p173, %p174
      %p176 = scmp.ne.s32.totalorder %s164, %s165
      %p177 = scmp.eq.s32.totalorder %s29, 1
      %p178 = por %p176, %p177
      %p180 = scmp.ne.s32.totalorder %s165, %s179
      %p181 = scmp.eq.s32.totalorder %s29, 0
      %p182 = por %p180, %p181
      %s184 = sadd.s32 %s183, 1
      %p187 = scmp.eq.s32.totalorder %s23, 1
      %p188 = scmp.ne.s32.totalorder %s183, %s185
      %p189 = scmp.eq.s32.totalorder %s23, 0
      %p190 = por %p188, %p189
      %p191 = scmp.ne.s32.totalorder %s183, %s185
      %p192 = scmp.eq.s32.totalorder %s28, 1
      %p193 = por %p191, %p192
      %p194 = scmp.ne.s32.totalorder %s185, %s186
      %p195 = scmp.eq.s32.totalorder %s28, 0
      %p196 = por %p194, %p195
      %p197 = scmp.ne.s32.totalorder %s185, %s186
      %p198 = scmp.eq.s32.totalorder %s29, 1
      %p199 = por %p197, %p198
      %p201 = scmp.ne.s32.totalorder %s186, %s200
      %p202 = scmp.eq.s32.totalorder %s29, 0
      %p203 = por %p201, %p202
      %s205 = sadd.s32 %s204, 1
      %p208 = scmp.eq.s32.totalorder %s23, 1
      %p209 = scmp.ne.s32.totalorder %s204, %s206
      %p210 = scmp.eq.s32.totalorder %s23, 0
      %p211 = por %p209, %p210
      %p212 = scmp.ne.s32.totalorder %s204, %s206
      %p213 = scmp.eq.s32.totalorder %s28, 1
      %p214 = por %p212, %p213
      %p215 = scmp.ne.s32.totalorder %s206, %s207
      %p216 = scmp.eq.s32.totalorder %s28, 0
      %p217 = por %p215, %p216
      %p218 = scmp.ne.s32.totalorder %s206, %s207
      %p219 = scmp.eq.s32.totalorder %s29, 1
      %p220 = por %p218, %p219
      %p222 = scmp.ne.s32.totalorder %s207, %s221
      %p223 = scmp.eq.s32.totalorder %s29, 0
      %p224 = por %p222, %p223
      %s225 = ssub.s32 %s30, %s42
      %s226 = ssub.s32 %s31, %s38
      %s227 = sor.u32 %s225, %s226
      %p228 = scmp.eq.s32.totalorder %s227, 0
      %s230 = sadd.s32 %s229, 1
      %s231 = scalar_select %p228, %s229, %s230
      %p234 = pneg %p228
      %p235 = scmp.eq.s32.totalorder %s23, 1
      %p236 = por %p234, %p235
      %p237 = scmp.ne.s32.totalorder %s229, %s232
      %p238 = scmp.eq.s32.totalorder %s23, 0
      %p239 = por %p237, %p238
      %p240 = scmp.ne.s32.totalorder %s229, %s232
      %p241 = scmp.eq.s32.totalorder %s28, 1
      %p242 = por %p240, %p241
      %p243 = scmp.ne.s32.totalorder %s232, %s233
      %p244 = scmp.eq.s32.totalorder %s28, 0
      %p245 = por %p243, %p244
      %p246 = scmp.ne.s32.totalorder %s232, %s233
      %p247 = scmp.eq.s32.totalorder %s29, 1
      %p248 = por %p246, %p247
      %p250 = scmp.ne.s32.totalorder %s233, %s249
      %p251 = scmp.eq.s32.totalorder %s29, 0
      %p252 = por %p250, %p251
      %s253 = ssub.s32 %s30, %s42
      %s254 = ssub.s32 %s31, %s38
      %s255 = sor.u32 %s253, %s254
      %p256 = scmp.eq.s32.totalorder %s255, 0
      %s258 = sadd.s32 %s257, 1
      %s259 = scalar_select %p256, %s257, %s258
      %p262 = pneg %p256
      %p263 = scmp.eq.s32.totalorder %s23, 1
      %p264 = por %p262, %p263
      %p265 = scmp.ne.s32.totalorder %s257, %s260
      %p266 = scmp.eq.s32.totalorder %s23, 0
      %p267 = por %p265, %p266
      %p268 = scmp.ne.s32.totalorder %s257, %s260
      %p269 = scmp.eq.s32.totalorder %s28, 1
      %p270 = por %p268, %p269
      %p271 = scmp.ne.s32.totalorder %s260, %s261
      %p272 = scmp.eq.s32.totalorder %s28, 0
      %p273 = por %p271, %p272
      %p274 = scmp.ne.s32.totalorder %s260, %s261
      %p275 = scmp.eq.s32.totalorder %s29, 1
      %p276 = por %p274, %p275
      %p278 = scmp.ne.s32.totalorder %s261, %s277
      %p279 = scmp.eq.s32.totalorder %s29, 0
      %p280 = por %p278, %p279
      %s281 = ssub.s32 %s30, %s42
      %s282 = ssub.s32 %s31, %s38
      %s283 = sor.u32 %s281, %s282
      %p284 = scmp.eq.s32.totalorder %s283, 0
      %s286 = sadd.s32 %s285, 1
      %s287 = scalar_select %p284, %s285, %s286
      %p290 = pneg %p284
      %p291 = scmp.eq.s32.totalorder %s23, 1
      %p292 = por %p290, %p291
      %p293 = scmp.ne.s32.totalorder %s285, %s288
      %p294 = scmp.eq.s32.totalorder %s23, 0
      %p295 = por %p293, %p294
      %p296 = scmp.ne.s32.totalorder %s285, %s288
      %p297 = scmp.eq.s32.totalorder %s28, 1
      %p298 = por %p296, %p297
      %p299 = scmp.ne.s32.totalorder %s288, %s289
      %p300 = scmp.eq.s32.totalorder %s28, 0
      %p301 = por %p299, %p300
      %p302 = scmp.ne.s32.totalorder %s288, %s289
      %p303 = scmp.eq.s32.totalorder %s29, 1
      %p304 = por %p302, %p303
      %p306 = scmp.ne.s32.totalorder %s289, %s305
      %p307 = scmp.eq.s32.totalorder %s29, 0
      %p308 = por %p306, %p307
      %p309 = scmp.le.s32.totalorder 1, %s23
      %p310 = scmp.lt.s32.totalorder %s23, 3
      %p311 = pnand %p309, %p310
      %p312 = pneg %p311
      // Predicated region
      $region9: #{tpu_custom_call.1} parent=5 // pred_check
        _
      $region10: #{tpu_custom_call.1} parent=5 // pred_check_branch
        %314 = sbr.rel (%p311) target = $region12
      $region11: #{tpu_custom_call.1} parent=5 // pred_region
        %s315 = ssub.s32 %s23, 1
        // Predicated region
        $region13: #{tpu_custom_call.1} parent=11 // pred_check
          %p316 = pneg %p112
        $region14: #{tpu_custom_call.1} parent=11 // pred_check_branch
          %318 = sbr.rel (%p316) target = $region16
        $region15: #{tpu_custom_call.1} parent=11 // pred_region
          _
        $region16: #{tpu_custom_call.1} parent=11 // pred_fallthru
          _
        // Predicated region
        $region17: #{tpu_custom_call.1} parent=11 // pred_check
          %p319 = pneg %p133
        $region18: #{tpu_custom_call.1} parent=11 // pred_check_branch
          %321 = sbr.rel (%p319) target = $region20
        $region19: #{tpu_custom_call.1} parent=11 // pred_region
          _
        $region20: #{tpu_custom_call.1} parent=11 // pred_fallthru
          _
        // Predicated region
        $region21: #{tpu_custom_call.1} parent=11 // pred_check
          %p322 = pneg %p154
        $region22: #{tpu_custom_call.1} parent=11 // pred_check_branch
          %324 = sbr.rel (%p322) target = $region24
        $region23: #{tpu_custom_call.1} parent=11 // pred_region
          _
        $region24: #{tpu_custom_call.1} parent=11 // pred_fallthru
          _
        // Predicated region
        $region25: #{tpu_custom_call.1} parent=11 // pred_check
          %p325 = pneg %p175
        $region26: #{tpu_custom_call.1} parent=11 // pred_check_branch
          %327 = sbr.rel (%p325) target = $region28
        $region27: #{tpu_custom_call.1} parent=11 // pred_region
          _
        $region28: #{tpu_custom_call.1} parent=11 // pred_fallthru
          _
        // Predicated region
        $region29: #{tpu_custom_call.1} parent=11 // pred_check
          %p328 = pneg %p196
        $region30: #{tpu_custom_call.1} parent=11 // pred_check_branch
          %330 = sbr.rel (%p328) target = $region32
        $region31: #{tpu_custom_call.1} parent=11 // pred_region
          _
        $region32: #{tpu_custom_call.1} parent=11 // pred_fallthru
          _
        // Predicated region
        $region33: #{tpu_custom_call.1} parent=11 // pred_check
          %p331 = pneg %p217
        $region34: #{tpu_custom_call.1} parent=11 // pred_check_branch
          %333 = sbr.rel (%p331) target = $region36
        $region35: #{tpu_custom_call.1} parent=11 // pred_region
          _
        $region36: #{tpu_custom_call.1} parent=11 // pred_fallthru
          _
      $region12: #{tpu_custom_call.1} parent=5 // pred_fallthru
        _
      %p334 = scmp.lt.s32.totalorder %s23, 2
      // Predicated region
      $region37: #{tpu_custom_call.1} parent=5 // pred_check
        %p335 = pneg %p334
      $region38: #{tpu_custom_call.1} parent=5 // pred_check_branch
        %337 = sbr.rel (%p335) target = $region40
      $region39: #{tpu_custom_call.1} parent=5 // pred_region
        // Predicated region
        $region41: #{tpu_custom_call.1} parent=39 // pred_check
          %p338 = pneg %p57
        $region42: #{tpu_custom_call.1} parent=39 // pred_check_branch
          %340 = sbr.rel (%p338) target = $region44
        $region43: #{tpu_custom_call.1} parent=39 // pred_region
          %s341 = smul.u32 2, %s31
          %p342 = scmp.lt.s32.totalorder %s30, 1
          %s343 = scalar_select %p342, %s30, 1
          %p344 = scmp.lt.s32.totalorder %s341, 1
          %s345 = scalar_select %p344, %s341, 1
          %s346 = smul.addr %s343, 2
          %s347 = sadd.s32 %s345, %s346
          %s348 = smul.addr %s347, 4
          %s349 = scalar_lea.vmem %s0, %s348
          %s350 = smul.u32 2, %s31
        $region44: #{tpu_custom_call.1} parent=39 // pred_fallthru
          _
        // Predicated region
        $region45: #{tpu_custom_call.1} parent=39 // pred_check
          %p351 = pneg %p85
        $region46: #{tpu_custom_call.1} parent=39 // pred_check_branch
          %353 = sbr.rel (%p351) target = $region48
        $region47: #{tpu_custom_call.1} parent=39 // pred_region
          %s354 = smul.u32 2, %s31
          %p355 = scmp.lt.s32.totalorder %s30, 1
          %s356 = scalar_select %p355, %s30, 1
          %p357 = scmp.lt.s32.totalorder %s354, 1
          %s358 = scalar_select %p357, %s354, 1
          %s359 = smul.addr %s356, 2
          %s360 = sadd.s32 %s358, %s359
          %s361 = smul.addr %s360, 4
          %s362 = scalar_lea.vmem %s1, %s361
          %s363 = smul.u32 2, %s31
        $region48: #{tpu_custom_call.1} parent=39 // pred_fallthru
          _
      $region40: #{tpu_custom_call.1} parent=5 // pred_fallthru
        _
      %p364 = scmp.le.s32.totalorder 1, %s23
      %p365 = scmp.lt.s32.totalorder %s23, 3
      %p366 = pnand %p364, %p365
      %p367 = pneg %p366
      // Predicated region
      $region49: #{tpu_custom_call.1} parent=5 // pred_check
        _
      $region50: #{tpu_custom_call.1} parent=5 // pred_check_branch
        %369 = sbr.rel (%p366) target = $region52
      $region51: #{tpu_custom_call.1} parent=5 // pred_region
        %s370 = ssub.s32 %s23, 1
        %s371 = smul.u32 2, %s33
        %p372 = scmp.lt.s32.totalorder %s32, 1
        %s373 = scalar_select %p372, %s32, 1
        %p374 = scmp.lt.s32.totalorder %s371, 1
        %s375 = scalar_select %p374, %s371, 1
        %s376 = smul.addr %s373, 2
        %s377 = sadd.s32 %s375, %s376
        %s378 = smul.addr %s377, 4
        %s379 = scalar_lea.vmem %s0, %s378
        %p380 = pneg %p63
        %p381 = pneg %p60
        %s382 = smul.u32 2, %s33
        %p383 = scmp.lt.s32.totalorder %s32, 1
        %s384 = scalar_select %p383, %s32, 1
        %p385 = scmp.lt.s32.totalorder %s382, 1
        %s386 = scalar_select %p385, %s382, 1
        %s387 = smul.addr %s384, 2
        %s388 = sadd.s32 %s386, %s387
        %s389 = smul.addr %s388, 4
        %s390 = scalar_lea.vmem %s1, %s389
        %p391 = pneg %p91
        %p392 = pneg %p88
        %p393 = pneg %p112
        %p394 = pneg %p109
        %p395 = pneg %p133
        %p396 = pneg %p130
        %p397 = pneg %p154
        %p398 = pneg %p151
        %p399 = pneg %p175
        %p400 = pneg %p172
        %p401 = pneg %p196
        %p402 = pneg %p193
        %p403 = pneg %p217
        %p404 = pneg %p214
        %p405 = pneg %p245
        %p406 = pneg %p242
        %s407 = sand.u32 %s232, 1
        %s408 = scalar_lea.sflag [#allocation3], %s407
        %s409 = sand.u32 %s232, 1
        %s410 = smul.addr %s409, 8
        %s411 = scalar_lea.vmem [#allocation2], %s410
        %p412 = pneg %p273
        %p413 = pneg %p270
        %s414 = sand.u32 %s28, 1
        %s415 = scalar_lea.sflag [#allocation5], %s414
        %s416 = sand.u32 %s260, 1
        %s417 = smul.addr %s416, 8
        %s418 = scalar_lea.vmem [#allocation4], %s417
        %p419 = pneg %p301
        %p420 = pneg %p298
        %s421 = sand.u32 %s28, 1
        %s422 = scalar_lea.sflag [#allocation5], %s421
        %s423 = sand.u32 %s288, 1
        %s424 = smul.addr %s423, 8
        %s425 = scalar_lea.vmem [#allocation6], %s424
        %s426 = smul.u32 2, %s33
        %p427 = scmp.lt.s32.totalorder %s32, 1
        %s428 = scalar_select %p427, %s32, 1
        %p429 = scmp.lt.s32.totalorder %s426, 1
        %s430 = scalar_select %p429, %s426, 1
        %s431 = smul.addr %s428, 2
        %s432 = sadd.s32 %s430, %s431
        %s433 = smul.addr %s432, 4
        %s434 = scalar_lea.vmem %s0, %s433
        %s435 = smul.u32 2, %s33
        %s436 = smul.u32 2, %s33
        %p437 = scmp.lt.s32.totalorder %s32, 1
        %s438 = scalar_select %p437, %s32, 1
        %p439 = scmp.lt.s32.totalorder %s436, 1
        %s440 = scalar_select %p439, %s436, 1
        %s441 = smul.addr %s438, 2
        %s442 = sadd.s32 %s440, %s441
        %s443 = smul.addr %s442, 4
        %s444 = scalar_lea.vmem %s1, %s443
        %s445 = smul.u32 2, %s33
        %s446 = smul.u32 2, %s33
        %s447 = smul.u32 2, %s33
        %s448 = smul.u32 2, %s33
        %v449 = vld [vmem:[%s2] sm:$0xff]
        %v450 = vld [vmem:[%s3] sm:$0xff]
        %v451 = vld [vmem:[%s4] sm:$0xf]
        %v452 = vld [vmem:[%s5] sm:$0xf]
        %v453 = vld [vmem:[%s6] sm:$0xf]
        %v454 = vld [vmem:[%s7] sm:$0xf]
        %v455 = vld [vmem:[%s434] sm:$0xff]
        %v456 = vld [vmem:[%s444] sm:$0xff]
        %458 = vset.pattern.permute.xlu0 0
        %459 = vperm.xlu0 %458, %v450
        %v460 = vpop.permute.xlu0 %459
        %v463 = vcombine.high %v455, %v455
        %vm464 = vcmask 31744
        %v466 = vsel %vm464, %v449, 0
        %vm468 = vcmask 1043456
        %v469 = vsel %vm468, %v455, 0
        %v471 = vsel %vm468, %v463, 0
        %473 = vmatprep.subr.mxu0 %v471
        %474 = vmatpush1.msra.mxu0 %v469
        %475 = vmatprep.subr.mxu0 0.0
        %476 = vmatpush1.msra.mxu0 0.0
        %477 = vmatprep.subr.mxu0 0.0
        %478 = vmatpush1.msra.mxu0 0.0
        %479 = vmatprep.subr.mxu0 0.0
        %480 = vmatpush1.msra.mxu0 0.0
        %481 = vmatprep.subr.mxu0 0.0
        %482 = vmatpush1.msra.mxu0 0.0
        %483 = vmatprep.subr.mxu0 0.0
        %484 = vmatpush1.msra.mxu0 0.0
        %485 = vmatprep.subr.mxu0 0.0
        %486 = vmatpush1.msra.mxu0 0.0
        %487 = vmatprep.subr.mxu0 0.0
        %488 = vmatpush1.msra.mxu0 0.0
        %489 = vmatprep.subr.mxu0 0.0
        %490 = vmatpush1.msra.mxu0 0.0
        %491 = vmatprep.subr.mxu0 0.0
        %492 = vmatpush1.msra.mxu0 0.0
        %493 = vmatprep.subr.mxu0 0.0
        %494 = vmatpush1.msra.mxu0 0.0
        %495 = vmatprep.subr.mxu0 0.0
        %496 = vmatpush1.msra.mxu0 0.0
        %497 = vmatprep.subr.mxu0 0.0
        %498 = vmatpush1.msra.mxu0 0.0
        %499 = vmatprep.subr.mxu0 0.0
        %500 = vmatpush1.msra.mxu0 0.0
        %501 = vmatprep.subr.mxu0 0.0
        %502 = vmatpush1.msra.mxu0 0.0
        %503 = vmatprep.subr.mxu0 0.0
        %504 = vmatpush1.msra.mxu0 0.0
        %505 = vmatprep.subr.mxu0 0.0
        %506 = vmatpush1.msra.mxu0 0.0
        %507 = vmatprep.subr.mxu0 0.0
        %508 = vmatpush1.msra.mxu0 0.0
        %509 = vmatprep.subr.mxu0 0.0
        %510 = vmatpush1.msra.mxu0 0.0
        %511 = vmatprep.subr.mxu0 0.0
        %512 = vmatpush1.msra.mxu0 0.0
        %513 = vmatprep.subr.mxu0 0.0
        %514 = vmatpush1.msra.mxu0 0.0
        %515 = vmatprep.subr.mxu0 0.0
        %516 = vmatpush1.msra.mxu0 0.0
        %517 = vmatprep.subr.mxu0 0.0
        %518 = vmatpush1.msra.mxu0 0.0
        %519 = vmatprep.subr.mxu0 0.0
        %520 = vmatpush1.msra.mxu0 0.0
        %521 = vmatprep.subr.mxu0 0.0
        %522 = vmatpush1.msra.mxu0 0.0
        %523 = vmatprep.subr.mxu0 0.0
        %524 = vmatpush1.msra.mxu0 0.0
        %525 = vmatprep.subr.mxu0 0.0
        %526 = vmatpush1.msra.mxu0 0.0
        %527 = vmatprep.subr.mxu0 0.0
        %528 = vmatpush1.msra.mxu0 0.0
        %529 = vmatprep.subr.mxu0 0.0
        %530 = vmatpush1.msra.mxu0 0.0
        %531 = vmatprep.subr.mxu0 0.0
        %532 = vmatpush1.msra.mxu0 0.0
        %533 = vmatprep.subr.mxu0 0.0
        %534 = vmatpush1.msra.mxu0 0.0
        %535 = vmatprep.subr.mxu0 0.0
        %536 = vmatpush1.msra.mxu0 0.0
        %537 = vmatprep.mubr.f32.mxu0 0.0
        %538 = vmatmul.mubr.f32.gmra.mrb[0].mxu0 %v466
        %v539 = vpop.f32.mrb[0].mxu0
        %v540 = vadd.f32 %v460, %v539
        %v541 = vpop.f32.mrb[0].mxu0
        %v542 = vadd.f32 %v460, %v541
        %543 = vdwg.mxu0
        %v544 = vmax.f32 %v540, 0.0
        %v545 = vmax.f32 %v542, 0.0
        %547 = vset.pattern.permute.xlu0 0
        %548 = vperm.xlu0 %547, %v452
        %v549 = vpop.permute.xlu0 %548
        %vm551 = vcmask 64512
        %v553 = vsel %vm551, %v451, 0
        %555 = vmatprep.subr.mxu0 %v545
        %556 = vmatpush1.msra.mxu0 %v544
        %557 = vmatprep.subr.mxu0 0.0
        %558 = vmatpush1.msra.mxu0 0.0
        %559 = vmatprep.subr.mxu0 0.0
        %560 = vmatpush1.msra.mxu0 0.0
        %561 = vmatprep.subr.mxu0 0.0
        %562 = vmatpush1.msra.mxu0 0.0
        %563 = vmatprep.subr.mxu0 0.0
        %564 = vmatpush1.msra.mxu0 0.0
        %565 = vmatprep.subr.mxu0 0.0
        %566 = vmatpush1.msra.mxu0 0.0
        %567 = vmatprep.subr.mxu0 0.0
        %568 = vmatpush1.msra.mxu0 0.0
        %569 = vmatprep.subr.mxu0 0.0
        %570 = vmatpush1.msra.mxu0 0.0
        %571 = vmatprep.subr.mxu0 0.0
        %572 = vmatpush1.msra.mxu0 0.0
        %573 = vmatprep.subr.mxu0 0.0
        %574 = vmatpush1.msra.mxu0 0.0
        %575 = vmatprep.subr.mxu0 0.0
        %576 = vmatpush1.msra.mxu0 0.0
        %577 = vmatprep.subr.mxu0 0.0
        %578 = vmatpush1.msra.mxu0 0.0
        %579 = vmatprep.subr.mxu0 0.0
        %580 = vmatpush1.msra.mxu0 0.0
        %581 = vmatprep.subr.mxu0 0.0
        %582 = vmatpush1.msra.mxu0 0.0
        %583 = vmatprep.subr.mxu0 0.0
        %584 = vmatpush1.msra.mxu0 0.0
        %585 = vmatprep.subr.mxu0 0.0
        %586 = vmatpush1.msra.mxu0 0.0
        %587 = vmatprep.subr.mxu0 0.0
        %588 = vmatpush1.msra.mxu0 0.0
        %589 = vmatprep.subr.mxu0 0.0
        %590 = vmatpush1.msra.mxu0 0.0
        %591 = vmatprep.subr.mxu0 0.0
        %592 = vmatpush1.msra.mxu0 0.0
        %593 = vmatprep.subr.mxu0 0.0
        %594 = vmatpush1.msra.mxu0 0.0
        %595 = vmatprep.subr.mxu0 0.0
        %596 = vmatpush1.msra.mxu0 0.0
        %597 = vmatprep.subr.mxu0 0.0
        %598 = vmatpush1.msra.mxu0 0.0
        %599 = vmatprep.subr.mxu0 0.0
        %600 = vmatpush1.msra.mxu0 0.0
        %601 = vmatprep.subr.mxu0 0.0
        %602 = vmatpush1.msra.mxu0 0.0
        %603 = vmatprep.subr.mxu0 0.0
        %604 = vmatpush1.msra.mxu0 0.0
        %605 = vmatprep.subr.mxu0 0.0
        %606 = vmatpush1.msra.mxu0 0.0
        %607 = vmatprep.subr.mxu0 0.0
        %608 = vmatpush1.msra.mxu0 0.0
        %609 = vmatprep.subr.mxu0 0.0
        %610 = vmatpush1.msra.mxu0 0.0
        %611 = vmatprep.subr.mxu0 0.0
        %612 = vmatpush1.msra.mxu0 0.0
        %613 = vmatprep.subr.mxu0 0.0
        %614 = vmatpush1.msra.mxu0 0.0
        %615 = vmatprep.subr.mxu0 0.0
        %616 = vmatpush1.msra.mxu0 0.0
        %617 = vmatprep.subr.mxu0 0.0
        %618 = vmatpush1.msra.mxu0 0.0
        %619 = vmatprep.mubr.f32.mxu0 0.0
        %620 = vmatmul.mubr.f32.gmra.mrb[0].mxu0 %v553
        %v621 = vpop.f32.mrb[0].mxu0
        %v622 = vadd.f32 %v549, %v621
        %v623 = vpop.f32.mrb[0].mxu0
        %v624 = vadd.f32 %v549, %v623
        %625 = vdwg.mxu0
        %627 = vset.pattern.permute.xlu0 0
        %628 = vperm.xlu0 %627, %v454
        %v629 = vpop.permute.xlu0 %628
        %v632 = vsel %vm551, %v453, 0
        %634 = vmatprep.subr.mxu0 %v545
        %635 = vmatpush1.msra.mxu0 %v544
        %636 = vmatprep.subr.mxu0 0.0
        %637 = vmatpush1.msra.mxu0 0.0
        %638 = vmatprep.subr.mxu0 0.0
        %639 = vmatpush1.msra.mxu0 0.0
        %640 = vmatprep.subr.mxu0 0.0
        %641 = vmatpush1.msra.mxu0 0.0
        %642 = vmatprep.subr.mxu0 0.0
        %643 = vmatpush1.msra.mxu0 0.0
        %644 = vmatprep.subr.mxu0 0.0
        %645 = vmatpush1.msra.mxu0 0.0
        %646 = vmatprep.subr.mxu0 0.0
        %647 = vmatpush1.msra.mxu0 0.0
        %648 = vmatprep.subr.mxu0 0.0
        %649 = vmatpush1.msra.mxu0 0.0
        %650 = vmatprep.subr.mxu0 0.0
        %651 = vmatpush1.msra.mxu0 0.0
        %652 = vmatprep.subr.mxu0 0.0
        %653 = vmatpush1.msra.mxu0 0.0
        %654 = vmatprep.subr.mxu0 0.0
        %655 = vmatpush1.msra.mxu0 0.0
        %656 = vmatprep.subr.mxu0 0.0
        %657 = vmatpush1.msra.mxu0 0.0
        %658 = vmatprep.subr.mxu0 0.0
        %659 = vmatpush1.msra.mxu0 0.0
        %660 = vmatprep.subr.mxu0 0.0
        %661 = vmatpush1.msra.mxu0 0.0
        %662 = vmatprep.subr.mxu0 0.0
        %663 = vmatpush1.msra.mxu0 0.0
        %664 = vmatprep.subr.mxu0 0.0
        %665 = vmatpush1.msra.mxu0 0.0
        %666 = vmatprep.subr.mxu0 0.0
        %667 = vmatpush1.msra.mxu0 0.0
        %668 = vmatprep.subr.mxu0 0.0
        %669 = vmatpush1.msra.mxu0 0.0
        %670 = vmatprep.subr.mxu0 0.0
        %671 = vmatpush1.msra.mxu0 0.0
        %672 = vmatprep.subr.mxu0 0.0
        %673 = vmatpush1.msra.mxu0 0.0
        %674 = vmatprep.subr.mxu0 0.0
        %675 = vmatpush1.msra.mxu0 0.0
        %676 = vmatprep.subr.mxu0 0.0
        %677 = vmatpush1.msra.mxu0 0.0
        %678 = vmatprep.subr.mxu0 0.0
        %679 = vmatpush1.msra.mxu0 0.0
        %680 = vmatprep.subr.mxu0 0.0
        %681 = vmatpush1.msra.mxu0 0.0
        %682 = vmatprep.subr.mxu0 0.0
        %683 = vmatpush1.msra.mxu0 0.0
        %684 = vmatprep.subr.mxu0 0.0
        %685 = vmatpush1.msra.mxu0 0.0
        %686 = vmatprep.subr.mxu0 0.0
        %687 = vmatpush1.msra.mxu0 0.0
        %688 = vmatprep.subr.mxu0 0.0
        %689 = vmatpush1.msra.mxu0 0.0
        %690 = vmatprep.subr.mxu0 0.0
        %691 = vmatpush1.msra.mxu0 0.0
        %692 = vmatprep.subr.mxu0 0.0
        %693 = vmatpush1.msra.mxu0 0.0
        %694 = vmatprep.subr.mxu0 0.0
        %695 = vmatpush1.msra.mxu0 0.0
        %696 = vmatprep.subr.mxu0 0.0
        %697 = vmatpush1.msra.mxu0 0.0
        %698 = vmatprep.mubr.f32.mxu0 0.0
        %699 = vmatmul.mubr.f32.gmra.mrb[0].mxu0 %v632
        %v700 = vpop.f32.mrb[0].mxu0
        %v701 = vadd.f32 %v629, %v700
        %v702 = vpop.f32.mrb[0].mxu0
        %v703 = vadd.f32 %v629, %v702
        %704 = vdwg.mxu0
        %v705 = vsub.f32 %v701, 5.0
        %v706 = vsub.f32 %v703, 5.0
        %v707 = vmax.f32 %v705, 0.0
        %v708 = vmax.f32 %v706, 0.0
        %v709 = vand.u32 2147483647, %v705
        %v710 = vand.u32 2147483647, %v706
        %v711 = vsub.f32 0.0, %v709
        %v712 = vsub.f32 0.0, %v710
        %v713 = vmul.f32 %v711, 1.442695
        %v714 = vpow.pop %v713
        %v715 = vmul.f32 %v712, 1.442695
        %v716 = vpow.pop %v715
        %v717 = vadd.f32 %v714, 1.0
        %v718 = vlog2.pop %v717
        %v719 = vmul.f32 %v718, 0.6931472
        %v720 = vmul.f32 -0.5, %v714
        %v721 = vadd.f32 %v720, 1.0
        %v722 = vmul.f32 %v721, %v714
        %v723 = vand.u32 2147483647, %v714
        %vm724 = vcmp.lt.f32.partialorder %v723, 0.0004427343
        %v725 = vsel %vm724, %v722, %v719
        %v726 = vadd.f32 %v716, 1.0
        %v727 = vlog2.pop %v726
        %v728 = vmul.f32 %v727, 0.6931472
        %v729 = vmul.f32 -0.5, %v716
        %v730 = vadd.f32 %v729, 1.0
        %v731 = vmul.f32 %v730, %v716
        %v732 = vand.u32 2147483647, %v716
        %vm733 = vcmp.lt.f32.partialorder %v732, 0.0004427343
        %v734 = vsel %vm733, %v731, %v728
        %v735 = vadd.f32 %v707, %v725
        %v736 = vadd.f32 %v708, %v734
        %v738 = vcombine.high %v456, %v456
        %v740 = vmul.f32 %v735, %v456
        %v741 = vmul.f32 %v736, %v738
        %v742 = vadd.f32 %v622, %v740
        %v743 = vadd.f32 %v624, %v741
        %v746 = vcombine.low %v622, %v624
        %748 = vst [vmem:[%s411] sm:$0xff] %v746
        %v751 = vcombine.low %v735, %v736
        %753 = vst [vmem:[%s418] sm:$0xff] %v751
        %v756 = vcombine.low %v742, %v743
        %758 = vst [vmem:[%s425] sm:$0xff] %v756
        %s759 = sand.u32 %s232, 1
        %s760 = scalar_lea.sflag [#allocation3], %s759
        %s761 = sand.u32 %s232, 1
        %s762 = smul.addr %s761, 8
        %s763 = scalar_lea.vmem [#allocation2], %s762
        %s764 = sand.u32 %s28, 1
        %s765 = scalar_lea.sflag [#allocation5], %s764
        %s766 = sand.u32 %s260, 1
        %s767 = smul.addr %s766, 8
        %s768 = scalar_lea.vmem [#allocation4], %s767
        %s769 = sand.u32 %s28, 1
        %s770 = scalar_lea.sflag [#allocation5], %s769
        %s771 = sand.u32 %s288, 1
        %s772 = smul.addr %s771, 8
        %s773 = scalar_lea.vmem [#allocation6], %s772
        // Predicated region
        $region53: #{tpu_custom_call.1} parent=51 // pred_check
          %p774 = pneg %p242
        $region54: #{tpu_custom_call.1} parent=51 // pred_check_branch
          %776 = sbr.rel (%p774) target = $region56
        $region55: #{tpu_custom_call.1} parent=51 // pred_region
          %s777 = smul.u32 2, %s33
          %s779 = ssub.s32 128, 128
          %780 = vsyncadd %s760, %s779
          %s781 = smul.addr %s32, 2
          %s782 = sadd.s32 %s777, %s781
          %s783 = smul.addr %s782, 64
          %s784 = scalar_lea.hbm %s8, %s783
          %s786 = sshll.u32 %s763, 4
          %s787 = int_to_ptr.vmem [resolvable:$true] %s786
          %789 = dma.vmem_to_hbm [thread:$0]  %s787, 128, %s784, %s760
        $region56: #{tpu_custom_call.1} parent=51 // pred_fallthru
          _
        // Predicated region
        $region57: #{tpu_custom_call.1} parent=51 // pred_check
          %p790 = pneg %p270
        $region58: #{tpu_custom_call.1} parent=51 // pred_check_branch
          %792 = sbr.rel (%p790) target = $region60
        $region59: #{tpu_custom_call.1} parent=51 // pred_region
          %s793 = smul.u32 2, %s33
          %s795 = ssub.s32 128, 128
          %796 = vsyncadd %s765, %s795
          %s797 = smul.addr %s32, 2
          %s798 = sadd.s32 %s793, %s797
          %s799 = smul.addr %s798, 64
          %s800 = scalar_lea.hbm %s9, %s799
          %s802 = sshll.u32 %s768, 4
          %s803 = int_to_ptr.vmem [resolvable:$true] %s802
          %805 = dma.vmem_to_hbm [thread:$0]  %s803, 128, %s800, %s765
        $region60: #{tpu_custom_call.1} parent=51 // pred_fallthru
          _
        // Predicated region
        $region61: #{tpu_custom_call.1} parent=51 // pred_check
          %p806 = pneg %p298
        $region62: #{tpu_custom_call.1} parent=51 // pred_check_branch
          %808 = sbr.rel (%p806) target = $region64
        $region63: #{tpu_custom_call.1} parent=51 // pred_region
          %s809 = smul.u32 2, %s33
          %s811 = ssub.s32 128, 128
          %812 = vsyncadd %s770, %s811
          %s813 = smul.addr %s32, 2
          %s814 = sadd.s32 %s809, %s813
          %s815 = smul.addr %s814, 64
          %s816 = scalar_lea.hbm %s10, %s815
          %s818 = sshll.u32 %s773, 4
          %s819 = int_to_ptr.vmem [resolvable:$true] %s818
          %821 = dma.vmem_to_hbm [thread:$0]  %s819, 128, %s816, %s770
        $region64: #{tpu_custom_call.1} parent=51 // pred_fallthru
          _
      $region52: #{tpu_custom_call.1} parent=5 // pred_fallthru
        _
      %p822 = scmp.le.s32.totalorder 2, %s23
      // Predicated region
      $region65: #{tpu_custom_call.1} parent=5 // pred_check
        %p823 = pneg %p822
      $region66: #{tpu_custom_call.1} parent=5 // pred_check_branch
        %825 = sbr.rel (%p823) target = $region68
      $region67: #{tpu_custom_call.1} parent=5 // pred_region
        %s826 = ssub.s32 %s23, 2
        // Predicated region
        $region69: #{tpu_custom_call.1} parent=67 // pred_check
          %p827 = pneg %p248
        $region70: #{tpu_custom_call.1} parent=67 // pred_check_branch
          %829 = sbr.rel (%p827) target = $region72
        $region71: #{tpu_custom_call.1} parent=67 // pred_region
          %s830 = sand.u32 %s233, 1
          %s831 = scalar_lea.sflag [#allocation3], %s830
          %s832 = sand.u32 %s233, 1
          %s833 = smul.addr %s832, 8
          %s834 = scalar_lea.vmem [#allocation2], %s833
          %835 = dma.done %s831, 128
        $region72: #{tpu_custom_call.1} parent=67 // pred_fallthru
          _
        // Predicated region
        $region73: #{tpu_custom_call.1} parent=67 // pred_check
          %p836 = pneg %p276
        $region74: #{tpu_custom_call.1} parent=67 // pred_check_branch
          %838 = sbr.rel (%p836) target = $region76
        $region75: #{tpu_custom_call.1} parent=67 // pred_region
          %s839 = sand.u32 %s29, 1
          %s840 = scalar_lea.sflag [#allocation5], %s839
          %s841 = sand.u32 %s261, 1
          %s842 = smul.addr %s841, 8
          %s843 = scalar_lea.vmem [#allocation4], %s842
          %844 = dma.done %s840, 128
        $region76: #{tpu_custom_call.1} parent=67 // pred_fallthru
          _
        // Predicated region
        $region77: #{tpu_custom_call.1} parent=67 // pred_check
          %p845 = pneg %p304
        $region78: #{tpu_custom_call.1} parent=67 // pred_check_branch
          %847 = sbr.rel (%p845) target = $region80
        $region79: #{tpu_custom_call.1} parent=67 // pred_region
          %s848 = sand.u32 %s29, 1
          %s849 = scalar_lea.sflag [#allocation5], %s848
          %s850 = sand.u32 %s289, 1
          %s851 = smul.addr %s850, 8
          %s852 = scalar_lea.vmem [#allocation6], %s851
          %853 = dma.done %s849, 128
        $region80: #{tpu_custom_call.1} parent=67 // pred_fallthru
          _
      $region68: #{tpu_custom_call.1} parent=5 // pred_fallthru
        _
    $region6: #{tpu_custom_call.1} parent=1 // loop_footer
      %s27 = sadd.s32 1, %s23
    $region7: #{tpu_custom_call.1} parent=1 // loop_footer_branch
      %22 = sbr.rel target = $region3
    $region8: #{tpu_custom_call.1} parent=1 // loop_exit
      _
    %854 = vsyncpa [#allocation3], 1
    %s855 = scalar_lea.sflag [#allocation3], 1
    %856 = vsyncpa %s855, 1
    %857 = vsyncpa [#allocation5], 1
    %s858 = scalar_lea.sflag [#allocation5], 1
    %859 = vsyncpa %s858, 1

// kernel: tpu_custom_call.1
$region0: #{tpu_custom_call.1}
  #allocation0 [shape = 'u32[]', space=smem, size = 0x4, offset = 0x4, fixed_abs, tag = 'smem constant byte address 0x4 - core index']
  #allocation1 [shape = 'u32[144,128]{1,0:T(1,128)}', space=vmem, size = 0x12000, scoped, tag = 'internal scratch']
  %s0 = inlined_call_operand.vmem [shape: f32[2,4,256], index: 0, kind: input, shape index: {}]
  %s1 = inlined_call_operand.vmem [shape: f32[2,4,256], index: 1, kind: input, shape index: {}]
  %s2 = inlined_call_operand.vmem [shape: f32[8,4], index: 2, kind: input, shape index: {}]
  %s3 = inlined_call_operand.vmem [shape: f32[8,1], index: 3, kind: input, shape index: {}]
  %s4 = inlined_call_operand.vmem [shape: f32[4,8], index: 4, kind: input, shape index: {}]
  %s5 = inlined_call_operand.vmem [shape: f32[4,1], index: 5, kind: input, shape index: {}]
  %s6 = inlined_call_operand.vmem [shape: f32[4,8], index: 6, kind: input, shape index: {}]
  %s7 = inlined_call_operand.vmem [shape: f32[4,1], index: 7, kind: input, shape index: {}]
  %s8 = inlined_call_operand.hbm [shape: f32[2,4,256], index: 8, kind: output, shape index: {0}]
  %s9 = inlined_call_operand.hbm [shape: f32[2,4,256], index: 9, kind: output, shape index: {1}]
  %s10 = inlined_call_operand.hbm [shape: f32[2,4,256], index: 10, kind: output, shape index: {2}]
  %11 = xla_tuple %s8, %s9, %s10
  %s12 = sld [smem:[#allocation0]]
  $region81: #{tpu_custom_call.1} parent=0
    _
  %s14 = ssub.s32 1, %s12
  %s15 = scalar_select 0, %s14, %s12
  $region1: #{tpu_custom_call.1} parent=0
    #allocation2 [shape = 'u8[8192]{0}', space=vmem, size = 0x2000, scoped, tag = 'output window, operand 0']
    #allocation3 [shape = 's32[2]{0}', space=sflag, size = 0x8, scoped, tag = 'scoped memory for tpu_custom_call.1']
    #allocation4 [shape = 'u8[8192]{0}', space=vmem, size = 0x2000, scoped, tag = 'output window, operand 1']
    #allocation5 [shape = 's32[2]{0}', space=sflag, size = 0x8, scoped, tag = 'scoped memory for tpu_custom_call.1']
    #allocation6 [shape = 'u8[8192]{0}', space=vmem, size = 0x2000, scoped, tag = 'output window, operand 2']
    %16 = vsyncpa [#allocation3], 0
    %s17 = scalar_lea.sflag [#allocation3], 1
    %18 = vsyncpa %s17, 0
    %19 = vsyncpa [#allocation5], 0
    %s20 = scalar_lea.sflag [#allocation5], 1
    %21 = vsyncpa %s20, 0
    loop: start=0, step=1, limit=4
    $region2: #{tpu_custom_call.1} parent=1 // loop_pre_header
      _
    $region3: #{tpu_custom_call.1} parent=1 // loop_header
      %s23 = sphi 0, %s27
      %p24 = scmp.ge.s32.totalorder %s23, 4
      %s30 = sphi 0, %s42
      %s31 = sphi 0, %s38
      %s32 = sphi 0, %s30
      %s33 = sphi 0, %s31
      %s34 = sphi 0, %s32
      %s35 = sphi 0, %s33
      %s47 = sphi 0, %s49
      %s50 = sphi 0, %s47
      %s51 = sphi 0, %s50
      %s67 = sphi 0, %s51
      %s75 = sphi 0, %s77
      %s78 = sphi 0, %s75
      %s79 = sphi 0, %s78
      %s95 = sphi 0, %s79
      %s99 = sphi 0, %s99
      %s101 = sphi 0, %s99
      %s102 = sphi 0, %s101
      %s116 = sphi 0, %s102
      %s120 = sphi 0, %s120
      %s122 = sphi 0, %s120
      %s123 = sphi 0, %s122
      %s137 = sphi 0, %s123
      %s141 = sphi 0, %s141
      %s143 = sphi 0, %s141
      %s144 = sphi 0, %s143
      %s158 = sphi 0, %s144
      %s162 = sphi 0, %s162
      %s164 = sphi 0, %s162
      %s165 = sphi 0, %s164
      %s179 = sphi 0, %s165
      %s183 = sphi 0, %s183
      %s185 = sphi 0, %s183
      %s186 = sphi 0, %s185
      %s200 = sphi 0, %s186
      %s204 = sphi 0, %s204
      %s206 = sphi 0, %s204
      %s207 = sphi 0, %s206
      %s221 = sphi 0, %s207
      %s229 = sphi 0, %s231
      %s232 = sphi 0, %s229
      %s233 = sphi 0, %s232
      %s249 = sphi 0, %s233
      %s257 = sphi 0, %s259
      %s260 = sphi 0, %s257
      %s261 = sphi 0, %s260
      %s277 = sphi 0, %s261
      %s285 = sphi 0, %s287
      %s288 = sphi 0, %s285
      %s289 = sphi 0, %s288
      %s305 = sphi 0, %s289
    $region4: #{tpu_custom_call.1} parent=1 // loop_header_branch
      %26 = sbr.rel (%p24) target = $region8
    $region5: #{tpu_custom_call.1} parent=1 // loop_body
      %s28 = ssub.s32 %s23, 1
      %s29 = ssub.s32 %s23, 2
      %s36 = sadd.s32 1, %s31
      %p37 = scmp.ge.s32.totalorder %s36, 1
      %s38 = scalar_select %p37, 0, %s36
      %s39 = sadd.s32 1, %s30
      %s40 = scalar_select %p37, %s39, %s30
      %p41 = scmp.ge.s32.totalorder %s40, 2
      %s42 = scalar_select %p41, 0, %s40
      %s43 = ssub.s32 %s30, %s42
      %s44 = ssub.s32 %s31, %s38
      %s45 = sor.u32 %s43, %s44
      %p46 = scmp.eq.s32.totalorder %s45, 0
      %s48 = sadd.s32 %s47, 1
      %s49 = scalar_select %p46, %s47, %s48
      %p52 = pneg %p46
      %p53 = scmp.eq.s32.totalorder %s23, 1
      %p54 = por %p52, %p53
      %p55 = scmp.ne.s32.totalorder %s47, %s50
      %p56 = scmp.eq.s32.totalorder %s23, 0
      %p57 = por %p55, %p56
      %p58 = scmp.ne.s32.totalorder %s47, %s50
      %p59 = scmp.eq.s32.totalorder %s28, 1
      %p60 = por %p58, %p59
      %p61 = scmp.ne.s32.totalorder %s50, %s51
      %p62 = scmp.eq.s32.totalorder %s28, 0
      %p63 = por %p61, %p62
      %p64 = scmp.ne.s32.totalorder %s50, %s51
      %p65 = scmp.eq.s32.totalorder %s29, 1
      %p66 = por %p64, %p65
      %p68 = scmp.ne.s32.totalorder %s51, %s67
      %p69 = scmp.eq.s32.totalorder %s29, 0
      %p70 = por %p68, %p69
      %s71 = ssub.s32 %s30, %s42
      %s72 = ssub.s32 %s31, %s38
      %s73 = sor.u32 %s71, %s72
      %p74 = scmp.eq.s32.totalorder %s73, 0
      %s76 = sadd.s32 %s75, 1
      %s77 = scalar_select %p74, %s75, %s76
      %p80 = pneg %p74
      %p81 = scmp.eq.s32.totalorder %s23, 1
      %p82 = por %p80, %p81
      %p83 = scmp.ne.s32.totalorder %s75, %s78
      %p84 = scmp.eq.s32.totalorder %s23, 0
      %p85 = por %p83, %p84
      %p86 = scmp.ne.s32.totalorder %s75, %s78
      %p87 = scmp.eq.s32.totalorder %s28, 1
      %p88 = por %p86, %p87
      %p89 = scmp.ne.s32.totalorder %s78, %s79
      %p90 = scmp.eq.s32.totalorder %s28, 0
      %p91 = por %p89, %p90
      %p92 = scmp.ne.s32.totalorder %s78, %s79
      %p93 = scmp.eq.s32.totalorder %s29, 1
      %p94 = por %p92, %p93
      %p96 = scmp.ne.s32.totalorder %s79, %s95
      %p97 = scmp.eq.s32.totalorder %s29, 0
      %p98 = por %p96, %p97
      %s100 = sadd.s32 %s99, 1
      %p103 = scmp.eq.s32.totalorder %s23, 1
      %p104 = scmp.ne.s32.totalorder %s99, %s101
      %p105 = scmp.eq.s32.totalorder %s23, 0
      %p106 = por %p104, %p105
      %p107 = scmp.ne.s32.totalorder %s99, %s101
      %p108 = scmp.eq.s32.totalorder %s28, 1
      %p109 = por %p107, %p108
      %p110 = scmp.ne.s32.totalorder %s101, %s102
      %p111 = scmp.eq.s32.totalorder %s28, 0
      %p112 = por %p110, %p111
      %p113 = scmp.ne.s32.totalorder %s101, %s102
      %p114 = scmp.eq.s32.totalorder %s29, 1
      %p115 = por %p113, %p114
      %p117 = scmp.ne.s32.totalorder %s102, %s116
      %p118 = scmp.eq.s32.totalorder %s29, 0
      %p119 = por %p117, %p118
      %s121 = sadd.s32 %s120, 1
      %p124 = scmp.eq.s32.totalorder %s23, 1
      %p125 = scmp.ne.s32.totalorder %s120, %s122
      %p126 = scmp.eq.s32.totalorder %s23, 0
      %p127 = por %p125, %p126
      %p128 = scmp.ne.s32.totalorder %s120, %s122
      %p129 = scmp.eq.s32.totalorder %s28, 1
      %p130 = por %p128, %p129
      %p131 = scmp.ne.s32.totalorder %s122, %s123
      %p132 = scmp.eq.s32.totalorder %s28, 0
      %p133 = por %p131, %p132
      %p134 = scmp.ne.s32.totalorder %s122, %s123
      %p135 = scmp.eq.s32.totalorder %s29, 1
      %p136 = por %p134, %p135
      %p138 = scmp.ne.s32.totalorder %s123, %s137
      %p139 = scmp.eq.s32.totalorder %s29, 0
      %p140 = por %p138, %p139
      %s142 = sadd.s32 %s141, 1
      %p145 = scmp.eq.s32.totalorder %s23, 1
      %p146 = scmp.ne.s32.totalorder %s141, %s143
      %p147 = scmp.eq.s32.totalorder %s23, 0
      %p148 = por %p146, %p147
      %p149 = scmp.ne.s32.totalorder %s141, %s143
      %p150 = scmp.eq.s32.totalorder %s28, 1
      %p151 = por %p149, %p150
      %p152 = scmp.ne.s32.totalorder %s143, %s144
      %p153 = scmp.eq.s32.totalorder %s28, 0
      %p154 = por %p152, %p153
      %p155 = scmp.ne.s32.totalorder %s143, %s144
      %p156 = scmp.eq.s32.totalorder %s29, 1
      %p157 = por %p155, %p156
      %p159 = scmp.ne.s32.totalorder %s144, %s158
      %p160 = scmp.eq.s32.totalorder %s29, 0
      %p161 = por %p159, %p160
      %s163 = sadd.s32 %s162, 1
      %p166 = scmp.eq.s32.totalorder %s23, 1
      %p167 = scmp.ne.s32.totalorder %s162, %s164
      %p168 = scmp.eq.s32.totalorder %s23, 0
      %p169 = por %p167, %p168
      %p170 = scmp.ne.s32.totalorder %s162, %s164
      %p171 = scmp.eq.s32.totalorder %s28, 1
      %p172 = por %p170, %p171
      %p173 = scmp.ne.s32.totalorder %s164, %s165
      %p174 = scmp.eq.s32.totalorder %s28, 0
      %p175 = por %p173, %p174
      %p176 = scmp.ne.s32.totalorder %s164, %s165
      %p177 = scmp.eq.s32.totalorder %s29, 1
      %p178 = por %p176, %p177
      %p180 = scmp.ne.s32.totalorder %s165, %s179
      %p181 = scmp.eq.s32.totalorder %s29, 0
      %p182 = por %p180, %p181
      %s184 = sadd.s32 %s183, 1
      %p187 = scmp.eq.s32.totalorder %s23, 1
      %p188 = scmp.ne.s32.totalorder %s183, %s185
      %p189 = scmp.eq.s32.totalorder %s23, 0
      %p190 = por %p188, %p189
      %p191 = scmp.ne.s32.totalorder %s183, %s185
      %p192 = scmp.eq.s32.totalorder %s28, 1
      %p193 = por %p191, %p192
      %p194 = scmp.ne.s32.totalorder %s185, %s186
      %p195 = scmp.eq.s32.totalorder %s28, 0
      %p196 = por %p194, %p195
      %p197 = scmp.ne.s32.totalorder %s185, %s186
      %p198 = scmp.eq.s32.totalorder %s29, 1
      %p199 = por %p197, %p198
      %p201 = scmp.ne.s32.totalorder %s186, %s200
      %p202 = scmp.eq.s32.totalorder %s29, 0
      %p203 = por %p201, %p202
      %s205 = sadd.s32 %s204, 1
      %p208 = scmp.eq.s32.totalorder %s23, 1
      %p209 = scmp.ne.s32.totalorder %s204, %s206
      %p210 = scmp.eq.s32.totalorder %s23, 0
      %p211 = por %p209, %p210
      %p212 = scmp.ne.s32.totalorder %s204, %s206
      %p213 = scmp.eq.s32.totalorder %s28, 1
      %p214 = por %p212, %p213
      %p215 = scmp.ne.s32.totalorder %s206, %s207
      %p216 = scmp.eq.s32.totalorder %s28, 0
      %p217 = por %p215, %p216
      %p218 = scmp.ne.s32.totalorder %s206, %s207
      %p219 = scmp.eq.s32.totalorder %s29, 1
      %p220 = por %p218, %p219
      %p222 = scmp.ne.s32.totalorder %s207, %s221
      %p223 = scmp.eq.s32.totalorder %s29, 0
      %p224 = por %p222, %p223
      %s225 = ssub.s32 %s30, %s42
      %s226 = ssub.s32 %s31, %s38
      %s227 = sor.u32 %s225, %s226
      %p228 = scmp.eq.s32.totalorder %s227, 0
      %s230 = sadd.s32 %s229, 1
      %s231 = scalar_select %p228, %s229, %s230
      %p234 = pneg %p228
      %p235 = scmp.eq.s32.totalorder %s23, 1
      %p236 = por %p234, %p235
      %p237 = scmp.ne.s32.totalorder %s229, %s232
      %p238 = scmp.eq.s32.totalorder %s23, 0
      %p239 = por %p237, %p238
      %p240 = scmp.ne.s32.totalorder %s229, %s232
      %p241 = scmp.eq.s32.totalorder %s28, 1
      %p242 = por %p240, %p241
      %p243 = scmp.ne.s32.totalorder %s232, %s233
      %p244 = scmp.eq.s32.totalorder %s28, 0
      %p245 = por %p243, %p244
      %p246 = scmp.ne.s32.totalorder %s232, %s233
      %p247 = scmp.eq.s32.totalorder %s29, 1
      %p248 = por %p246, %p247
      %p250 = scmp.ne.s32.totalorder %s233, %s249
      %p251 = scmp.eq.s32.totalorder %s29, 0
      %p252 = por %p250, %p251
      %s253 = ssub.s32 %s30, %s42
      %s254 = ssub.s32 %s31, %s38
      %s255 = sor.u32 %s253, %s254
      %p256 = scmp.eq.s32.totalorder %s255, 0
      %s258 = sadd.s32 %s257, 1
      %s259 = scalar_select %p256, %s257, %s258
      %p262 = pneg %p256
      %p263 = scmp.eq.s32.totalorder %s23, 1
      %p264 = por %p262, %p263
      %p265 = scmp.ne.s32.totalorder %s257, %s260
      %p266 = scmp.eq.s32.totalorder %s23, 0
      %p267 = por %p265, %p266
      %p268 = scmp.ne.s32.totalorder %s257, %s260
      %p269 = scmp.eq.s32.totalorder %s28, 1
      %p270 = por %p268, %p269
      %p271 = scmp.ne.s32.totalorder %s260, %s261
      %p272 = scmp.eq.s32.totalorder %s28, 0
      %p273 = por %p271, %p272
      %p274 = scmp.ne.s32.totalorder %s260, %s261
      %p275 = scmp.eq.s32.totalorder %s29, 1
      %p276 = por %p274, %p275
      %p278 = scmp.ne.s32.totalorder %s261, %s277
      %p279 = scmp.eq.s32.totalorder %s29, 0
      %p280 = por %p278, %p279
      %s281 = ssub.s32 %s30, %s42
      %s282 = ssub.s32 %s31, %s38
      %s283 = sor.u32 %s281, %s282
      %p284 = scmp.eq.s32.totalorder %s283, 0
      %s286 = sadd.s32 %s285, 1
      %s287 = scalar_select %p284, %s285, %s286
      %p290 = pneg %p284
      %p291 = scmp.eq.s32.totalorder %s23, 1
      %p292 = por %p290, %p291
      %p293 = scmp.ne.s32.totalorder %s285, %s288
      %p294 = scmp.eq.s32.totalorder %s23, 0
      %p295 = por %p293, %p294
      %p296 = scmp.ne.s32.totalorder %s285, %s288
      %p297 = scmp.eq.s32.totalorder %s28, 1
      %p298 = por %p296, %p297
      %p299 = scmp.ne.s32.totalorder %s288, %s289
      %p300 = scmp.eq.s32.totalorder %s28, 0
      %p301 = por %p299, %p300
      %p302 = scmp.ne.s32.totalorder %s288, %s289
      %p303 = scmp.eq.s32.totalorder %s29, 1
      %p304 = por %p302, %p303
      %p306 = scmp.ne.s32.totalorder %s289, %s305
      %p307 = scmp.eq.s32.totalorder %s29, 0
      %p308 = por %p306, %p307
      %p309 = scmp.le.s32.totalorder 1, %s23
      %p310 = scmp.lt.s32.totalorder %s23, 3
      %p311 = pnand %p309, %p310
      %p312 = pneg %p311
      // Predicated region
      $region9: #{tpu_custom_call.1} parent=5 // pred_check
        _
      $region10: #{tpu_custom_call.1} parent=5 // pred_check_branch
        %314 = sbr.rel (%p311) target = $region12
      $region11: #{tpu_custom_call.1} parent=5 // pred_region
        %s315 = ssub.s32 %s23, 1
        // Predicated region
        $region13: #{tpu_custom_call.1} parent=11 // pred_check
          %p316 = pneg %p112
        $region14: #{tpu_custom_call.1} parent=11 // pred_check_branch
          %318 = sbr.rel (%p316) target = $region16
        $region15: #{tpu_custom_call.1} parent=11 // pred_region
          _
        $region16: #{tpu_custom_call.1} parent=11 // pred_fallthru
          _
        // Predicated region
        $region17: #{tpu_custom_call.1} parent=11 // pred_check
          %p319 = pneg %p133
        $region18: #{tpu_custom_call.1} parent=11 // pred_check_branch
          %321 = sbr.rel (%p319) target = $region20
        $region19: #{tpu_custom_call.1} parent=11 // pred_region
          _
        $region20: #{tpu_custom_call.1} parent=11 // pred_fallthru
          _
        // Predicated region
        $region21: #{tpu_custom_call.1} parent=11 // pred_check
          %p322 = pneg %p154
        $region22: #{tpu_custom_call.1} parent=11 // pred_check_branch
          %324 = sbr.rel (%p322) target = $region24
        $region23: #{tpu_custom_call.1} parent=11 // pred_region
          _
        $region24: #{tpu_custom_call.1} parent=11 // pred_fallthru
          _
        // Predicated region
        $region25: #{tpu_custom_call.1} parent=11 // pred_check
          %p325 = pneg %p175
        $region26: #{tpu_custom_call.1} parent=11 // pred_check_branch
          %327 = sbr.rel (%p325) target = $region28
        $region27: #{tpu_custom_call.1} parent=11 // pred_region
          _
        $region28: #{tpu_custom_call.1} parent=11 // pred_fallthru
          _
        // Predicated region
        $region29: #{tpu_custom_call.1} parent=11 // pred_check
          %p328 = pneg %p196
        $region30: #{tpu_custom_call.1} parent=11 // pred_check_branch
          %330 = sbr.rel (%p328) target = $region32
        $region31: #{tpu_custom_call.1} parent=11 // pred_region
          _
        $region32: #{tpu_custom_call.1} parent=11 // pred_fallthru
          _
        // Predicated region
        $region33: #{tpu_custom_call.1} parent=11 // pred_check
          %p331 = pneg %p217
        $region34: #{tpu_custom_call.1} parent=11 // pred_check_branch
          %333 = sbr.rel (%p331) target = $region36
        $region35: #{tpu_custom_call.1} parent=11 // pred_region
          _
        $region36: #{tpu_custom_call.1} parent=11 // pred_fallthru
          _
      $region12: #{tpu_custom_call.1} parent=5 // pred_fallthru
        _
      %p334 = scmp.lt.s32.totalorder %s23, 2
      // Predicated region
      $region37: #{tpu_custom_call.1} parent=5 // pred_check
        %p335 = pneg %p334
      $region38: #{tpu_custom_call.1} parent=5 // pred_check_branch
        %337 = sbr.rel (%p335) target = $region40
      $region39: #{tpu_custom_call.1} parent=5 // pred_region
        // Predicated region
        $region41: #{tpu_custom_call.1} parent=39 // pred_check
          %p338 = pneg %p57
        $region42: #{tpu_custom_call.1} parent=39 // pred_check_branch
          %340 = sbr.rel (%p338) target = $region44
        $region43: #{tpu_custom_call.1} parent=39 // pred_region
          %s341 = smul.u32 2, %s31
          %p342 = scmp.lt.s32.totalorder %s30, 1
          %s343 = scalar_select %p342, %s30, 1
          %p344 = scmp.lt.s32.totalorder %s341, 1
          %s345 = scalar_select %p344, %s341, 1
          %s346 = smul.addr %s343, 2
          %s347 = sadd.s32 %s345, %s346
          %s348 = smul.addr %s347, 4
          %s349 = scalar_lea.vmem %s0, %s348
          %s350 = smul.u32 2, %s31
        $region44: #{tpu_custom_call.1} parent=39 // pred_fallthru
          _
        // Predicated region
        $region45: #{tpu_custom_call.1} parent=39 // pred_check
          %p351 = pneg %p85
        $region46: #{tpu_custom_call.1} parent=39 // pred_check_branch
          %353 = sbr.rel (%p351) target = $region48
        $region47: #{tpu_custom_call.1} parent=39 // pred_region
          %s354 = smul.u32 2, %s31
          %p355 = scmp.lt.s32.totalorder %s30, 1
          %s356 = scalar_select %p355, %s30, 1
          %p357 = scmp.lt.s32.totalorder %s354, 1
          %s358 = scalar_select %p357, %s354, 1
          %s359 = smul.addr %s356, 2
          %s360 = sadd.s32 %s358, %s359
          %s361 = smul.addr %s360, 4
          %s362 = scalar_lea.vmem %s1, %s361
          %s363 = smul.u32 2, %s31
        $region48: #{tpu_custom_call.1} parent=39 // pred_fallthru
          _
      $region40: #{tpu_custom_call.1} parent=5 // pred_fallthru
        _
      %p364 = scmp.le.s32.totalorder 1, %s23
      %p365 = scmp.lt.s32.totalorder %s23, 3
      %p366 = pnand %p364, %p365
      %p367 = pneg %p366
      // Predicated region
      $region49: #{tpu_custom_call.1} parent=5 // pred_check
        _
      $region50: #{tpu_custom_call.1} parent=5 // pred_check_branch
        %369 = sbr.rel (%p366) target = $region52
      $region51: #{tpu_custom_call.1} parent=5 // pred_region
        %s370 = ssub.s32 %s23, 1
        %s371 = smul.u32 2, %s33
        %p372 = scmp.lt.s32.totalorder %s32, 1
        %s373 = scalar_select %p372, %s32, 1
        %p374 = scmp.lt.s32.totalorder %s371, 1
        %s375 = scalar_select %p374, %s371, 1
        %s376 = smul.addr %s373, 2
        %s377 = sadd.s32 %s375, %s376
        %s378 = smul.addr %s377, 4
        %s379 = scalar_lea.vmem %s0, %s378
        %p380 = pneg %p63
        %p381 = pneg %p60
        %s382 = smul.u32 2, %s33
        %p383 = scmp.lt.s32.totalorder %s32, 1
        %s384 = scalar_select %p383, %s32, 1
        %p385 = scmp.lt.s32.totalorder %s382, 1
        %s386 = scalar_select %p385, %s382, 1
        %s387 = smul.addr %s384, 2
        %s388 = sadd.s32 %s386, %s387
        %s389 = smul.addr %s388, 4
        %s390 = scalar_lea.vmem %s1, %s389
        %p391 = pneg %p91
        %p392 = pneg %p88
        %p393 = pneg %p112
        %p394 = pneg %p109
        %p395 = pneg %p133
        %p396 = pneg %p130
        %p397 = pneg %p154
        %p398 = pneg %p151
        %p399 = pneg %p175
        %p400 = pneg %p172
        %p401 = pneg %p196
        %p402 = pneg %p193
        %p403 = pneg %p217
        %p404 = pneg %p214
        %p405 = pneg %p245
        %p406 = pneg %p242
        %s407 = sand.u32 %s232, 1
        %s408 = scalar_lea.sflag [#allocation3], %s407
        %s409 = sand.u32 %s232, 1
        %s410 = smul.addr %s409, 8
        %s411 = scalar_lea.vmem [#allocation2], %s410
        %p412 = pneg %p273
        %p413 = pneg %p270
        %s414 = sand.u32 %s28, 1
        %s415 = scalar_lea.sflag [#allocation5], %s414
        %s416 = sand.u32 %s260, 1
        %s417 = smul.addr %s416, 8
        %s418 = scalar_lea.vmem [#allocation4], %s417
        %p419 = pneg %p301
        %p420 = pneg %p298
        %s421 = sand.u32 %s28, 1
        %s422 = scalar_lea.sflag [#allocation5], %s421
        %s423 = sand.u32 %s288, 1
        %s424 = smul.addr %s423, 8
        %s425 = scalar_lea.vmem [#allocation6], %s424
        %s426 = smul.u32 2, %s33
        %p427 = scmp.lt.s32.totalorder %s32, 1
        %s428 = scalar_select %p427, %s32, 1
        %p429 = scmp.lt.s32.totalorder %s426, 1
        %s430 = scalar_select %p429, %s426, 1
        %s431 = smul.addr %s428, 2
        %s432 = sadd.s32 %s430, %s431
        %s433 = smul.addr %s432, 4
        %s434 = scalar_lea.vmem %s0, %s433
        %s435 = smul.u32 2, %s33
        %s436 = smul.u32 2, %s33
        %p437 = scmp.lt.s32.totalorder %s32, 1
        %s438 = scalar_select %p437, %s32, 1
        %p439 = scmp.lt.s32.totalorder %s436, 1
        %s440 = scalar_select %p439, %s436, 1
        %s441 = smul.addr %s438, 2
        %s442 = sadd.s32 %s440, %s441
        %s443 = smul.addr %s442, 4
        %s444 = scalar_lea.vmem %s1, %s443
        %s445 = smul.u32 2, %s33
        %s446 = smul.u32 2, %s33
        %s447 = smul.u32 2, %s33
        %s448 = smul.u32 2, %s33
        %v449 = vld [vmem:[%s2] sm:$0xff]
        %v450 = vld [vmem:[%s3] sm:$0xff]
        %v451 = vld [vmem:[%s4] sm:$0xf]
        %v452 = vld [vmem:[%s5] sm:$0xf]
        %v453 = vld [vmem:[%s6] sm:$0xf]
        %v454 = vld [vmem:[%s7] sm:$0xf]
        %v455 = vld [vmem:[%s434] sm:$0xff]
        %v456 = vld [vmem:[%s444] sm:$0xff]
        %458 = vset.pattern.permute.xlu0 0
        %459 = vperm.xlu0 %458, %v450
        %v460 = vpop.permute.xlu0 %459
        %v463 = vcombine.high %v455, %v455
        %vm464 = vcmask 31744
        %v466 = vsel %vm464, %v449, 0
        %vm468 = vcmask 1043456
        %v469 = vsel %vm468, %v455, 0
        %v471 = vsel %vm468, %v463, 0
        %473 = vmatprep.subr.mxu0 %v471
        %474 = vmatpush1.msra.mxu0 %v469
        %475 = vmatprep.subr.mxu0 0.0
        %476 = vmatpush1.msra.mxu0 0.0
        %477 = vmatprep.subr.mxu0 0.0
        %478 = vmatpush1.msra.mxu0 0.0
        %479 = vmatprep.subr.mxu0 0.0
        %480 = vmatpush1.msra.mxu0 0.0
        %481 = vmatprep.subr.mxu0 0.0
        %482 = vmatpush1.msra.mxu0 0.0
        %483 = vmatprep.subr.mxu0 0.0
        %484 = vmatpush1.msra.mxu0 0.0
        %485 = vmatprep.subr.mxu0 0.0
        %486 = vmatpush1.msra.mxu0 0.0
        %487 = vmatprep.subr.mxu0 0.0
        %488 = vmatpush1.msra.mxu0 0.0
        %489 = vmatprep.subr.mxu0 0.0
        %490 = vmatpush1.msra.mxu0 0.0
        %491 = vmatprep.subr.mxu0 0.0
        %492 = vmatpush1.msra.mxu0 0.0
        %493 = vmatprep.subr.mxu0 0.0
        %494 = vmatpush1.msra.mxu0 0.0
        %495 = vmatprep.subr.mxu0 0.0
        %496 = vmatpush1.msra.mxu0 0.0
        %497 = vmatprep.subr.mxu0 0.0
        %498 = vmatpush1.msra.mxu0 0.0
        %499 = vmatprep.subr.mxu0 0.0
        %500 = vmatpush1.msra.mxu0 0.0
        %501 = vmatprep.subr.mxu0 0.0
        %502 = vmatpush1.msra.mxu0 0.0
        %503 = vmatprep.subr.mxu0 0.0
        %504 = vmatpush1.msra.mxu0 0.0
        %505 = vmatprep.subr.mxu0 0.0
        %506 = vmatpush1.msra.mxu0 0.0
        %507 = vmatprep.subr.mxu0 0.0
        %508 = vmatpush1.msra.mxu0 0.0
        %509 = vmatprep.subr.mxu0 0.0
        %510 = vmatpush1.msra.mxu0 0.0
        %511 = vmatprep.subr.mxu0 0.0
        %512 = vmatpush1.msra.mxu0 0.0
        %513 = vmatprep.subr.mxu0 0.0
        %514 = vmatpush1.msra.mxu0 0.0
        %515 = vmatprep.subr.mxu0 0.0
        %516 = vmatpush1.msra.mxu0 0.0
        %517 = vmatprep.subr.mxu0 0.0
        %518 = vmatpush1.msra.mxu0 0.0
        %519 = vmatprep.subr.mxu0 0.0
        %520 = vmatpush1.msra.mxu0 0.0
        %521 = vmatprep.subr.mxu0 0.0
        %522 = vmatpush1.msra.mxu0 0.0
        %523 = vmatprep.subr.mxu0 0.0
        %524 = vmatpush1.msra.mxu0 0.0
        %525 = vmatprep.subr.mxu0 0.0
        %526 = vmatpush1.msra.mxu0 0.0
        %527 = vmatprep.subr.mxu0 0.0
        %528 = vmatpush1.msra.mxu0 0.0
        %529 = vmatprep.subr.mxu0 0.0
        %530 = vmatpush1.msra.mxu0 0.0
        %531 = vmatprep.subr.mxu0 0.0
        %532 = vmatpush1.msra.mxu0 0.0
        %533 = vmatprep.subr.mxu0 0.0
        %534 = vmatpush1.msra.mxu0 0.0
        %535 = vmatprep.subr.mxu0 0.0
        %536 = vmatpush1.msra.mxu0 0.0
        %537 = vmatprep.mubr.f32.mxu0 0.0
        %538 = vmatmul.mubr.f32.gmra.mrb[0].mxu0 %v466
        %v539 = vpop.f32.mrb[0].mxu0
        %v540 = vadd.f32 %v460, %v539
        %v541 = vpop.f32.mrb[0].mxu0
        %v542 = vadd.f32 %v460, %v541
        %543 = vdwg.mxu0
        %v544 = vmax.f32 %v540, 0.0
        %v545 = vmax.f32 %v542, 0.0
        %547 = vset.pattern.permute.xlu0 0
        %548 = vperm.xlu0 %547, %v452
        %v549 = vpop.permute.xlu0 %548
        %vm551 = vcmask 64512
        %v553 = vsel %vm551, %v451, 0
        %555 = vmatprep.subr.mxu0 %v545
        %556 = vmatpush1.msra.mxu0 %v544
        %557 = vmatprep.subr.mxu0 0.0
        %558 = vmatpush1.msra.mxu0 0.0
        %559 = vmatprep.subr.mxu0 0.0
        %560 = vmatpush1.msra.mxu0 0.0
        %561 = vmatprep.subr.mxu0 0.0
        %562 = vmatpush1.msra.mxu0 0.0
        %563 = vmatprep.subr.mxu0 0.0
        %564 = vmatpush1.msra.mxu0 0.0
        %565 = vmatprep.subr.mxu0 0.0
        %566 = vmatpush1.msra.mxu0 0.0
        %567 = vmatprep.subr.mxu0 0.0
        %568 = vmatpush1.msra.mxu0 0.0
        %569 = vmatprep.subr.mxu0 0.0
        %570 = vmatpush1.msra.mxu0 0.0
        %571 = vmatprep.subr.mxu0 0.0
        %572 = vmatpush1.msra.mxu0 0.0
        %573 = vmatprep.subr.mxu0 0.0
        %574 = vmatpush1.msra.mxu0 0.0
        %575 = vmatprep.subr.mxu0 0.0
        %576 = vmatpush1.msra.mxu0 0.0
        %577 = vmatprep.subr.mxu0 0.0
        %578 = vmatpush1.msra.mxu0 0.0
        %579 = vmatprep.subr.mxu0 0.0
        %580 = vmatpush1.msra.mxu0 0.0
        %581 = vmatprep.subr.mxu0 0.0
        %582 = vmatpush1.msra.mxu0 0.0
        %583 = vmatprep.subr.mxu0 0.0
        %584 = vmatpush1.msra.mxu0 0.0
        %585 = vmatprep.subr.mxu0 0.0
        %586 = vmatpush1.msra.mxu0 0.0
        %587 = vmatprep.subr.mxu0 0.0
        %588 = vmatpush1.msra.mxu0 0.0
        %589 = vmatprep.subr.mxu0 0.0
        %590 = vmatpush1.msra.mxu0 0.0
        %591 = vmatprep.subr.mxu0 0.0
        %592 = vmatpush1.msra.mxu0 0.0
        %593 = vmatprep.subr.mxu0 0.0
        %594 = vmatpush1.msra.mxu0 0.0
        %595 = vmatprep.subr.mxu0 0.0
        %596 = vmatpush1.msra.mxu0 0.0
        %597 = vmatprep.subr.mxu0 0.0
        %598 = vmatpush1.msra.mxu0 0.0
        %599 = vmatprep.subr.mxu0 0.0
        %600 = vmatpush1.msra.mxu0 0.0
        %601 = vmatprep.subr.mxu0 0.0
        %602 = vmatpush1.msra.mxu0 0.0
        %603 = vmatprep.subr.mxu0 0.0
        %604 = vmatpush1.msra.mxu0 0.0
        %605 = vmatprep.subr.mxu0 0.0
        %606 = vmatpush1.msra.mxu0 0.0
        %607 = vmatprep.subr.mxu0 0.0
        %608 = vmatpush1.msra.mxu0 0.0
        %609 = vmatprep.subr.mxu0 0.0
        %610 = vmatpush1.msra.mxu0 0.0
        %611 = vmatprep.subr.mxu0 0.0
        %612 = vmatpush1.msra.mxu0 0.0
        %613 = vmatprep.subr.mxu0 0.0
        %614 = vmatpush1.msra.mxu0 0.0
        %615 = vmatprep.subr.mxu0 0.0
        %616 = vmatpush1.msra.mxu0 0.0
        %617 = vmatprep.subr.mxu0 0.0
        %618 = vmatpush1.msra.mxu0 0.0
        %619 = vmatprep.mubr.f32.mxu0 0.0
        %620 = vmatmul.mubr.f32.gmra.mrb[0].mxu0 %v553
        %v621 = vpop.f32.mrb[0].mxu0
        %v622 = vadd.f32 %v549, %v621
        %v623 = vpop.f32.mrb[0].mxu0
        %v624 = vadd.f32 %v549, %v623
        %625 = vdwg.mxu0
        %627 = vset.pattern.permute.xlu0 0
        %628 = vperm.xlu0 %627, %v454
        %v629 = vpop.permute.xlu0 %628
        %v632 = vsel %vm551, %v453, 0
        %634 = vmatprep.subr.mxu0 %v545
        %635 = vmatpush1.msra.mxu0 %v544
        %636 = vmatprep.subr.mxu0 0.0
        %637 = vmatpush1.msra.mxu0 0.0
        %638 = vmatprep.subr.mxu0 0.0
        %639 = vmatpush1.msra.mxu0 0.0
        %640 = vmatprep.subr.mxu0 0.0
        %641 = vmatpush1.msra.mxu0 0.0
        %642 = vmatprep.subr.mxu0 0.0
        %643 = vmatpush1.msra.mxu0 0.0
        %644 = vmatprep.subr.mxu0 0.0
        %645 = vmatpush1.msra.mxu0 0.0
        %646 = vmatprep.subr.mxu0 0.0
        %647 = vmatpush1.msra.mxu0 0.0
        %648 = vmatprep.subr.mxu0 0.0
        %649 = vmatpush1.msra.mxu0 0.0
        %650 = vmatprep.subr.mxu0 0.0
        %651 = vmatpush1.msra.mxu0 0.0
        %652 = vmatprep.subr.mxu0 0.0
        %653 = vmatpush1.msra.mxu0 0.0
        %654 = vmatprep.subr.mxu0 0.0
        %655 = vmatpush1.msra.mxu0 0.0
        %656 = vmatprep.subr.mxu0 0.0
        %657 = vmatpush1.msra.mxu0 0.0
        %658 = vmatprep.subr.mxu0 0.0
        %659 = vmatpush1.msra.mxu0 0.0
        %660 = vmatprep.subr.mxu0 0.0
        %661 = vmatpush1.msra.mxu0 0.0
        %662 = vmatprep.subr.mxu0 0.0
        %663 = vmatpush1.msra.mxu0 0.0
        %664 = vmatprep.subr.mxu0 0.0
        %665 = vmatpush1.msra.mxu0 0.0
        %666 = vmatprep.subr.mxu0 0.0
        %667 = vmatpush1.msra.mxu0 0.0
        %668 = vmatprep.subr.mxu0 0.0
        %669 = vmatpush1.msra.mxu0 0.0
        %670 = vmatprep.subr.mxu0 0.0
        %671 = vmatpush1.msra.mxu0 0.0
        %672 = vmatprep.subr.mxu0 0.0
        %673 = vmatpush1.msra.mxu0 0.0
        %674 = vmatprep.subr.mxu0 0.0
        %675 = vmatpush1.msra.mxu0 0.0
        %676 = vmatprep.subr.mxu0 0.0
        %677 = vmatpush1.msra.mxu0 0.0
        %678 = vmatprep.subr.mxu0 0.0
        %679 = vmatpush1.msra.mxu0 0.0
        %680 = vmatprep.subr.mxu0 0.0
        %681 = vmatpush1.msra.mxu0 0.0
        %682 = vmatprep.subr.mxu0 0.0
        %683 = vmatpush1.msra.mxu0 0.0
        %684 = vmatprep.subr.mxu0 0.0
        %685 = vmatpush1.msra.mxu0 0.0
        %686 = vmatprep.subr.mxu0 0.0
        %687 = vmatpush1.msra.mxu0 0.0
        %688 = vmatprep.subr.mxu0 0.0
        %689 = vmatpush1.msra.mxu0 0.0
        %690 = vmatprep.subr.mxu0 0.0
        %691 = vmatpush1.msra.mxu0 0.0
        %692 = vmatprep.subr.mxu0 0.0
        %693 = vmatpush1.msra.mxu0 0.0
        %694 = vmatprep.subr.mxu0 0.0
        %695 = vmatpush1.msra.mxu0 0.0
        %696 = vmatprep.subr.mxu0 0.0
        %697 = vmatpush1.msra.mxu0 0.0
        %698 = vmatprep.mubr.f32.mxu0 0.0
        %699 = vmatmul.mubr.f32.gmra.mrb[0].mxu0 %v632
        %v700 = vpop.f32.mrb[0].mxu0
        %v701 = vadd.f32 %v629, %v700
        %v702 = vpop.f32.mrb[0].mxu0
        %v703 = vadd.f32 %v629, %v702
        %704 = vdwg.mxu0
        %v705 = vsub.f32 %v701, 5.0
        %v706 = vsub.f32 %v703, 5.0
        %v707 = vmax.f32 %v705, 0.0
        %v708 = vmax.f32 %v706, 0.0
        %v709 = vand.u32 2147483647, %v705
        %v710 = vand.u32 2147483647, %v706
        %v711 = vsub.f32 0.0, %v709
        %v712 = vsub.f32 0.0, %v710
        %v713 = vmul.f32 %v711, 1.442695
        %v714 = vpow.pop %v713
        %v715 = vmul.f32 %v712, 1.442695
        %v716 = vpow.pop %v715
        %v717 = vadd.f32 %v714, 1.0
        %v718 = vlog2.pop %v717
        %v719 = vmul.f32 %v718, 0.6931472
        %v720 = vmul.f32 -0.5, %v714
        %v721 = vadd.f32 %v720, 1.0
        %v722 = vmul.f32 %v721, %v714
        %v723 = vand.u32 2147483647, %v714
        %vm724 = vcmp.lt.f32.partialorder %v723, 0.0004427343
        %v725 = vsel %vm724, %v722, %v719
        %v726 = vadd.f32 %v716, 1.0
        %v727 = vlog2.pop %v726
        %v728 = vmul.f32 %v727, 0.6931472
        %v729 = vmul.f32 -0.5, %v716
        %v730 = vadd.f32 %v729, 1.0
        %v731 = vmul.f32 %v730, %v716
        %v732 = vand.u32 2147483647, %v716
        %vm733 = vcmp.lt.f32.partialorder %v732, 0.0004427343
        %v734 = vsel %vm733, %v731, %v728
        %v735 = vadd.f32 %v707, %v725
        %v736 = vadd.f32 %v708, %v734
        %v738 = vcombine.high %v456, %v456
        %v740 = vmul.f32 %v735, %v456
        %v741 = vmul.f32 %v736, %v738
        %v742 = vadd.f32 %v622, %v740
        %v743 = vadd.f32 %v624, %v741
        %v746 = vcombine.low %v622, %v624
        %748 = vst [vmem:[%s411] sm:$0xff] %v746
        %v751 = vcombine.low %v735, %v736
        %753 = vst [vmem:[%s418] sm:$0xff] %v751
        %v756 = vcombine.low %v742, %v743
        %758 = vst [vmem:[%s425] sm:$0xff] %v756
        %s759 = sand.u32 %s232, 1
        %s760 = scalar_lea.sflag [#allocation3], %s759
        %s761 = sand.u32 %s232, 1
        %s762 = smul.addr %s761, 8
        %s763 = scalar_lea.vmem [#allocation2], %s762
        %s764 = sand.u32 %s28, 1
        %s765 = scalar_lea.sflag [#allocation5], %s764
        %s766 = sand.u32 %s260, 1
        %s767 = smul.addr %s766, 8
        %s768 = scalar_lea.vmem [#allocation4], %s767
        %s769 = sand.u32 %s28, 1
        %s770 = scalar_lea.sflag [#allocation5], %s769
        %s771 = sand.u32 %s288, 1
        %s772 = smul.addr %s771, 8
        %s773 = scalar_lea.vmem [#allocation6], %s772
        // Predicated region
        $region53: #{tpu_custom_call.1} parent=51 // pred_check
          %p774 = pneg %p242
        $region54: #{tpu_custom_call.1} parent=51 // pred_check_branch
          %776 = sbr.rel (%p774) target = $region56
        $region55: #{tpu_custom_call.1} parent=51 // pred_region
          %s777 = smul.u32 2, %s33
          %s779 = ssub.s32 128, 128
          %780 = vsyncadd %s760, %s779
          %s781 = smul.addr %s32, 2
          %s782 = sadd.s32 %s777, %s781
          %s783 = smul.addr %s782, 64
          %s784 = scalar_lea.hbm %s8, %s783
          %s786 = sshll.u32 %s763, 4
          %s787 = int_to_ptr.vmem [resolvable:$true] %s786
          %789 = dma.vmem_to_hbm [thread:$0]  %s787, 128, %s784, %s760
        $region56: #{tpu_custom_call.1} parent=51 // pred_fallthru
          _
        // Predicated region
        $region57: #{tpu_custom_call.1} parent=51 // pred_check
          %p790 = pneg %p270
        $region58: #{tpu_custom_call.1} parent=51 // pred_check_branch
          %792 = sbr.rel (%p790) target = $region60
        $region59: #{tpu_custom_call.1} parent=51 // pred_region
          %s793 = smul.u32 2, %s33
          %s795 = ssub.s32 128, 128
          %796 = vsyncadd %s765, %s795
          %s797 = smul.addr %s32, 2
          %s798 = sadd.s32 %s793, %s797
          %s799 = smul.addr %s798, 64
          %s800 = scalar_lea.hbm %s9, %s799
          %s802 = sshll.u32 %s768, 4
          %s803 = int_to_ptr.vmem [resolvable:$true] %s802
          %805 = dma.vmem_to_hbm [thread:$0]  %s803, 128, %s800, %s765
        $region60: #{tpu_custom_call.1} parent=51 // pred_fallthru
          _
        // Predicated region
        $region61: #{tpu_custom_call.1} parent=51 // pred_check
          %p806 = pneg %p298
        $region62: #{tpu_custom_call.1} parent=51 // pred_check_branch
          %808 = sbr.rel (%p806) target = $region64
        $region63: #{tpu_custom_call.1} parent=51 // pred_region
          %s809 = smul.u32 2, %s33
          %s811 = ssub.s32 128, 128
          %812 = vsyncadd %s770, %s811
          %s813 = smul.addr %s32, 2
          %s814 = sadd.s32 %s809, %s813
          %s815 = smul.addr %s814, 64
          %s816 = scalar_lea.hbm %s10, %s815
          %s818 = sshll.u32 %s773, 4
          %s819 = int_to_ptr.vmem [resolvable:$true] %s818
          %821 = dma.vmem_to_hbm [thread:$0]  %s819, 128, %s816, %s770
        $region64: #{tpu_custom_call.1} parent=51 // pred_fallthru
          _
      $region52: #{tpu_custom_call.1} parent=5 // pred_fallthru
        _
      %p822 = scmp.le.s32.totalorder 2, %s23
      // Predicated region
      $region65: #{tpu_custom_call.1} parent=5 // pred_check
        %p823 = pneg %p822
      $region66: #{tpu_custom_call.1} parent=5 // pred_check_branch
        %825 = sbr.rel (%p823) target = $region68
      $region67: #{tpu_custom_call.1} parent=5 // pred_region
        %s826 = ssub.s32 %s23, 2
        // Predicated region
        $region69: #{tpu_custom_call.1} parent=67 // pred_check
          %p827 = pneg %p248
        $region70: #{tpu_custom_call.1} parent=67 // pred_check_branch
          %829 = sbr.rel (%p827) target = $region72
        $region71: #{tpu_custom_call.1} parent=67 // pred_region
          %s830 = sand.u32 %s233, 1
          %s831 = scalar_lea.sflag [#allocation3], %s830
          %s832 = sand.u32 %s233, 1
          %s833 = smul.addr %s832, 8
          %s834 = scalar_lea.vmem [#allocation2], %s833
          %835 = dma.done %s831, 128
        $region72: #{tpu_custom_call.1} parent=67 // pred_fallthru
          _
        // Predicated region
        $region73: #{tpu_custom_call.1} parent=67 // pred_check
          %p836 = pneg %p276
        $region74: #{tpu_custom_call.1} parent=67 // pred_check_branch
          %838 = sbr.rel (%p836) target = $region76
        $region75: #{tpu_custom_call.1} parent=67 // pred_region
          %s839 = sand.u32 %s29, 1
          %s840 = scalar_lea.sflag [#allocation5], %s839
          %s841 = sand.u32 %s261, 1
          %s842 = smul.addr %s841, 8
          %s843 = scalar_lea.vmem [#allocation4], %s842
          %844 = dma.done %s840, 128
        $region76: #{tpu_custom_call.1} parent=67 // pred_fallthru
          _
        // Predicated region
        $region77: #{tpu_custom_call.1} parent=67 // pred_check
          %p845 = pneg %p304
        $region78: #{tpu_custom_call.1} parent=67 // pred_check_branch
          %847 = sbr.rel (%p845) target = $region80
        $region79: #{tpu_custom_call.1} parent=67 // pred_region
          %s848 = sand.u32 %s29, 1
          %s849 = scalar_lea.sflag [#allocation5], %s848
          %s850 = sand.u32 %s289, 1
          %s851 = smul.addr %s850, 8
          %s852 = scalar_lea.vmem [#allocation6], %s851
          %853 = dma.done %s849, 128
        $region80: #{tpu_custom_call.1} parent=67 // pred_fallthru
          _
      $region68: #{tpu_custom_call.1} parent=5 // pred_fallthru
        _
    $region6: #{tpu_custom_call.1} parent=1 // loop_footer
      %s27 = sadd.s32 1, %s23
    $region7: #{tpu_custom_call.1} parent=1 // loop_footer_branch
      %22 = sbr.rel target = $region3
    $region8: #{tpu_custom_call.1} parent=1 // loop_exit
      _
    %854 = vsyncpa [#allocation3], 1
    %s855 = scalar_lea.sflag [#allocation3], 1
    %856 = vsyncpa %s855, 1
    %857 = vsyncpa [#allocation5], 1
    %s858 = scalar_lea.sflag [#allocation5], 1
    %859 = vsyncpa %s858, 1

</llo_original>
